<compile_context>
chip_gen: v5e
topology: v5e:2x2
jax: 0.10.0
libtpu: 0.0.40
codegen_flags: <defaults>
</compile_context>

<pallas_src>
import functools

import jax
import jax.numpy as jnp
from jax.experimental import pallas as pl
from jax.experimental.pallas import tpu as pltpu

EPS = 1e-6
_MB = 1024 * 1024


def _cdiv(a, b):
    return -(-a // b)


def _round_up(a, b):
    return _cdiv(a, b) * b


def _device_config():
    """Per-generation VMEM budget / limit, bf16 wide-path flag, min row-grid steps."""
    dev = jax.devices()[0]
    kind = dev.device_kind.lower()
    on_tpu = dev.platform == "tpu"
    if "v7" in kind:
        # 64 MiB physical VMEM per TC -> conservative budget, 2 TCs -> >=4 row steps.
        return dict(budget=36 * _MB, vmem_limit=48 * _MB, wide_bf16=True,
                    min_steps=4, hw_prng=on_tpu)
    if "v6" in kind:
        return dict(budget=64 * _MB, vmem_limit=96 * _MB, wide_bf16=True,
                    min_steps=2, hw_prng=on_tpu)
    if "v5" in kind:
        return dict(budget=56 * _MB, vmem_limit=80 * _MB, wide_bf16=False,
                    min_steps=2, hw_prng=on_tpu)
    # Unknown TPU / non-TPU fallback: conservative, software-hash dropout off-TPU.
    return dict(budget=20 * _MB, vmem_limit=32 * _MB, wide_bf16=False,
                min_steps=2, hw_prng=on_tpu)


def _choose_tiles(m_rows, d_model, cfg):
    """Pick (tile_m, tile_n, n_tiles) from the per-generation VMEM budget."""
    budget = cfg["budget"]

    # Resident bf16 weight slab (Pallas double-buffers every input by default).
    tile_n = d_model
    if 2 * 2 * d_model * d_model > budget // 2:
        # Weight too big to stay resident in one piece: tile W's output columns.
        for cand in (2048, 1024, 512, 256):
            if cand < d_model and d_model % cand == 0 and 2 * 2 * d_model * cand <= budget // 2:
                tile_n = cand
                break
        # TODO(synk): d_model not divisible by 256 with a huge weight falls back to the
        #             monolithic resident weight (may exceed the VMEM budget).
    n_tiles = _cdiv(d_model, tile_n)

    # Per-row VMEM bytes: double-buffered x block + in-body x/diff f32 + normed bf16,
    # plus double-buffered out block + y f32 + dropout mask, plus the bf16 scratch.
    per_row = d_model * (2 * 4 + 4 + 4 + 2) + tile_n * (2 * 4 + 4 + 4)
    if n_tiles > 1:
        per_row += d_model * 2
    fixed = 2 * 2 * d_model * tile_n + 2 * 4 * tile_n + (64 << 10)

    tile_m = max(8, ((budget - fixed) // per_row) // 8 * 8)
    # Target ~2-4 MiB f32 (tile_m, D) block; amortizes per-step pipeline overhead.
    cap = max(256, min(4096, ((4 << 20) // (4 * d_model)) // 8 * 8))
    tile_m = min(tile_m, cap)
    # Keep at least `min_steps` row-grid steps so the pipeline (and both v7x TCs) stay busy.
    tile_m = min(tile_m, max(8, _round_up(_cdiv(m_rows, cfg["min_steps"]), 8)))
    return tile_m, tile_n, n_tiles


def _residual_kernel(seed_ref, ab_ref, x_ref, w_ref, b_ref, o_ref, *scratch,
                     dropout_rate, d_model, tile_m, tile_n, n_tiles,
                     drop_threshold, wide_bf16, hw_prng):
    i = pl.program_id(0)
    j = pl.program_id(1)
    alpha = ab_ref[0]                        # scalar LayerNorm gain (SMEM)
    beta = ab_ref[1]                         # scalar LayerNorm bias (SMEM)

    def _layernorm():
        # torch semantics: unbiased std (N-1 divisor), divide by (std + eps).
        x = x_ref[...].astype(jnp.float32)                       # (tile_m, D)
        mean = jnp.mean(x, axis=-1, keepdims=True)
        diff = x - mean
        var = jnp.sum(diff * diff, axis=-1, keepdims=True) * (
            1.0 / float(max(d_model - 1, 1)))
        std = jnp.sqrt(var)
        # Reciprocal on the narrow (tile_m, 1) column only -> EUP slot, wide path is FMA.
        inv = pl.reciprocal(std + EPS, approx=True)
        scale = alpha * inv
        if wide_bf16:
            normed = (diff.astype(jnp.bfloat16) * scale.astype(jnp.bfloat16)
                      + beta.astype(jnp.bfloat16))
        else:
            normed = (diff * scale + beta).astype(jnp.bfloat16)
        return x, normed

    if n_tiles == 1:
        # Common path: full-width weight, everything in registers, no scratch.
        x_res, normed = _layernorm()
    else:
        # Large-D path: LayerNorm once per row tile into a bf16 scratch, reused per N tile.
        normed_buf = scratch[0]

        @pl.when(j == 0)
        def _():
            normed_buf[...] = _layernorm()[1]

        normed = normed_buf[...]
        col0 = pl.multiple_of(j * tile_n, tile_n)
        x_res = x_ref[:, pl.ds(col0, tile_n)].astype(jnp.float32)

    # --- sublayer: Linear(D -> D) slice: bf16 operands, f32 accumulation on the MXU ---
    y = jnp.dot(normed, w_ref[...], preferred_element_type=jnp.float32)
    y = y + b_ref[...].astype(jnp.float32)

    # --- dropout (inverted; hardware PRNG per tile, uint32 threshold compare) ---
    if dropout_rate > 0.0:
        if hw_prng:
            pltpu.prng_seed(seed_ref[0] + i * n_tiles + j)
            raw = pltpu.prng_random_bits((tile_m, tile_n))
            rbits = raw if raw.dtype == jnp.uint32 else pltpu.bitcast(raw, jnp.uint32)
        else:
            # Non-TPU fallback: counter-based lowbias32 hash keyed on absolute position.
            row0 = (i * tile_m).astype(jnp.uint32)
            col0u = (j * tile_n).astype(jnp.uint32)
            rows = jax.lax.broadcasted_iota(jnp.uint32, (tile_m, tile_n), 0) + row0
            cols = jax.lax.broadcasted_iota(jnp.uint32, (tile_m, tile_n), 1) + col0u
            h = rows * jnp.uint32(d_model) + cols + seed_ref[0].astype(jnp.uint32)
            h = h ^ (h >> 16)
            h = h * jnp.uint32(0x7FEB352D)
            h = h ^ (h >> 15)
            h = h * jnp.uint32(0x846CA68B)
            rbits = h ^ (h >> 16)
        keep = rbits >= jnp.uint32(drop_threshold)                # P(keep) = 1 - p
        y = jnp.where(keep, y * jnp.float32(1.0 / (1.0 - dropout_rate)),
                      jnp.float32(0.0))

    # --- residual add in f32; lane-dense full-width store ---
    o_ref[...] = (x_res + y).astype(o_ref.dtype)


def residual_connection(x, w, b, alpha, beta, *, dropout_rate=0.1, seed=0,
                        donate_x=False):
    """x: (B, S, D).  Returns x + dropout(Linear(LayerNorm(x)))."""
    B, S, D = x.shape
    M = B * S
    cfg = _device_config()
    tile_m, tile_n, n_tiles = _choose_tiles(M, D, cfg)

    x2 = x.reshape(M, D)                               # no padding copy
    seed_arr = jnp.asarray([seed], dtype=jnp.int32)
    ab = jnp.stack([jnp.asarray(alpha, jnp.float32).reshape(()),
                    jnp.asarray(beta, jnp.float32).reshape(())])
    w_bf16 = w.astype(jnp.bfloat16)                    # resident weight: half the VMEM/HBM
    b2 = b.reshape(1, D).astype(jnp.float32)

    p = float(dropout_rate)
    drop_threshold = min(int(round(p * 2.0 ** 32)), 2 ** 32 - 1)

    kernel = functools.partial(
        _residual_kernel, dropout_rate=p, d_model=D, tile_m=tile_m, tile_n=tile_n,
        n_tiles=n_tiles, drop_threshold=drop_threshold,
        wide_bf16=cfg["wide_bf16"], hw_prng=cfg["hw_prng"])

    grid = (_cdiv(M, tile_m), n_tiles)                 # partial tail row tile handled by Pallas
    scratch = [pltpu.VMEM((tile_m, D), jnp.bfloat16)] if n_tiles > 1 else []

    # x2 is operand index 2 (after seed and ab); alias only if the caller donates x.
    io_aliases = {2: 0} if donate_x else {}

    out = pl.pallas_call(
        kernel,
        out_shape=jax.ShapeDtypeStruct((M, D), x.dtype),
        grid_spec=pltpu.PrefetchScalarGridSpec(
            num_scalar_prefetch=0,
            grid=grid,
            in_specs=[
                pl.BlockSpec(memory_space=pltpu.MemorySpace.SMEM),    # seed (1,) int32
                pl.BlockSpec(memory_space=pltpu.MemorySpace.SMEM),    # [alpha, beta] f32
                pl.BlockSpec((tile_m, D), lambda i, j: (i, 0)),       # x rows (revisited over j)
                pl.BlockSpec((D, tile_n), lambda i, j: (0, j)),       # W slab (resident over i)
                pl.BlockSpec((1, tile_n), lambda i, j: (0, j)),       # bias slab
            ],
            out_specs=pl.BlockSpec((tile_m, tile_n), lambda i, j: (i, j)),
            scratch_shapes=scratch,
        ),
        compiler_params=pltpu.CompilerParams(
            dimension_semantics=("parallel", "arbitrary"),   # rows across TCs; N-axis carries scratch
            vmem_limit_bytes=cfg["vmem_limit"],
        ),
        input_output_aliases=io_aliases,
    )(seed_arr, ab, x2, w_bf16, b2)

    return out.reshape(B, S, D)


def _reference_eval(x, w, b, alpha, beta):
    """Pure-JAX reference for dropout_rate == 0 (eval mode), torch LayerNorm semantics."""
    mean = x.mean(axis=-1, keepdims=True)
    std = jnp.std(x, axis=-1, keepdims=True, ddof=1)      # torch.std default: unbiased
    normed = alpha * (x - mean) / (std + EPS) + beta
    return x + (normed @ w + b)


if __name__ == "__main__":
    B, S, D = 2, 256, 128
    key = jax.random.PRNGKey(0)
    kx, kw = jax.random.split(key)

    x = jax.random.normal(kx, (B, S, D), dtype=jnp.float32)

    # LayerNormalization params: alpha = ones(1), bias = zeros(1)
    alpha = jnp.ones((), jnp.float32)
    beta = jnp.zeros((), jnp.float32)
    # Sublayer Linear(D, D): deterministic weights, zero bias.
    w = jax.random.normal(kw, (D, D), dtype=jnp.float32) * (1.0 / jnp.sqrt(D))
    b = jnp.zeros((D,), jnp.float32)

    # Eval mode (dropout = identity): must match the pure-JAX reference (bf16 matmul -> loose tol).
    out_eval = residual_connection(x, w, b, alpha, beta, dropout_rate=0.0, seed=0)
    jax.block_until_ready(out_eval)
    ref = _reference_eval(x, w, b, alpha, beta)
    assert jnp.allclose(out_eval, ref, atol=5e-2, rtol=5e-2), "mismatch vs reference"

    # Training mode: inverted dropout with p = 0.1; dropped positions satisfy out == x exactly.
    out_train = residual_connection(x, w, b, alpha, beta, dropout_rate=0.1, seed=1234)
    jax.block_until_ready(out_train)
    drop_frac = float(jnp.mean((out_train == x).astype(jnp.float32)))
    assert 0.05 < drop_frac < 0.15, f"unexpected dropout fraction {drop_frac}"

    print("KERNEL_OK")
</pallas_src>

<mosaic_0001>
module attributes {stable_mosaic.version = 11 : i64} {
  func.func @_residual_kernel(%arg0: i32, %arg1: i32, %arg2: memref<1xi32, #tpu.memory_space<smem>>, %arg3: memref<2xf32, #tpu.memory_space<smem>>, %arg4: memref<256x128xf32, #tpu.memory_space<vmem>>, %arg5: memref<128x128xbf16, #tpu.memory_space<vmem>>, %arg6: memref<1x128xf32, #tpu.memory_space<vmem>>, %arg7: memref<256x128xf32, #tpu.memory_space<vmem>>) attributes {dimension_semantics = [#tpu.dimension_semantics<parallel>, #tpu.dimension_semantics<arbitrary>], iteration_bounds = array<i64: 2, 1>, scalar_prefetch = 0 : i64, scratch_operands = 0 : i64, tpu.core_type = #tpu.core_type<tc>, window_params = [{transform_indices = @transform_0, window_bounds = array<i64: 1>}, {transform_indices = @transform_1, window_bounds = array<i64: 2>}, {transform_indices = @transform_2, window_bounds = array<i64: 256, 128>}, {transform_indices = @transform_3, window_bounds = array<i64: 128, 128>}, {transform_indices = @transform_4, window_bounds = array<i64: 1, 128>}, {transform_indices = @transform_5, window_bounds = array<i64: 256, 128>}]} {
    %c0 = arith.constant 0 : index
    %0 = memref.load %arg3[%c0] : memref<2xf32, #tpu.memory_space<smem>>
    %c1 = arith.constant 1 : index
    %1 = memref.load %arg3[%c1] : memref<2xf32, #tpu.memory_space<smem>>
    %c0_0 = arith.constant 0 : index
    %c0_1 = arith.constant 0 : index
    %2 = vector.load %arg4[%c0_0, %c0_1] : memref<256x128xf32, #tpu.memory_space<vmem>>, vector<256x128xf32>
    %cst = arith.constant dense<0.000000e+00> : vector<256xf32>
    %3 = vector.multi_reduction <add>, %2, %cst [1] : vector<256x128xf32> to vector<256xf32>
    %4 = vector.shape_cast %3 : vector<256xf32> to vector<256x1xf32>
    %cst_2 = arith.constant 1.280000e+02 : f32
    %5 = vector.broadcast %cst_2 : f32 to vector<256x1xf32>
    %6 = arith.divf %4, %5 : vector<256x1xf32>
    %7 = vector.broadcast %6 : vector<256x1xf32> to vector<256x128xf32>
    %8 = arith.subf %2, %7 : vector<256x128xf32>
    %9 = arith.mulf %8, %8 : vector<256x128xf32>
    %cst_3 = arith.constant dense<0.000000e+00> : vector<256xf32>
    %10 = vector.multi_reduction <add>, %9, %cst_3 [1] : vector<256x128xf32> to vector<256xf32>
    %11 = vector.shape_cast %10 : vector<256xf32> to vector<256x1xf32>
    %cst_4 = arith.constant 0.00787401571 : f32
    %12 = vector.broadcast %cst_4 : f32 to vector<256x1xf32>
    %13 = arith.mulf %11, %12 : vector<256x1xf32>
    %14 = math.sqrt %13 : vector<256x1xf32>
    %cst_5 = arith.constant 9.99999997E-7 : f32
    %15 = vector.broadcast %cst_5 : f32 to vector<256x1xf32>
    %16 = arith.addf %14, %15 : vector<256x1xf32>
    %17 = tpu.reciprocal %16 {approx = true} : vector<256x1xf32> -> vector<256x1xf32>
    %18 = vector.broadcast %0 : f32 to vector<256x1xf32>
    %19 = arith.mulf %18, %17 : vector<256x1xf32>
    %20 = vector.broadcast %19 : vector<256x1xf32> to vector<256x128xf32>
    %21 = arith.mulf %8, %20 : vector<256x128xf32>
    %22 = vector.broadcast %1 : f32 to vector<256x128xf32>
    %23 = arith.addf %21, %22 : vector<256x128xf32>
    %24 = arith.truncf %23 : vector<256x128xf32> to vector<256x128xbf16>
    %c0_6 = arith.constant 0 : index
    %c0_7 = arith.constant 0 : index
    %25 = vector.load %arg5[%c0_6, %c0_7] : memref<128x128xbf16, #tpu.memory_space<vmem>>, vector<128x128xbf16>
    %cst_8 = arith.constant dense<0.000000e+00> : vector<256x128xf32>
    %26 = tpu.matmul %24, %25, %cst_8 {dimension_numbers = #tpu.dot_dimension_numbers<[1], [0], [0], [1], [0, 0, 1, 1], [], []>} : vector<256x128xbf16>, vector<128x128xbf16>, vector<256x128xf32> -> vector<256x128xf32>
    %c0_9 = arith.constant 0 : index
    %c0_10 = arith.constant 0 : index
    %27 = vector.load %arg6[%c0_9, %c0_10] : memref<1x128xf32, #tpu.memory_space<vmem>>, vector<1x128xf32>
    %28 = vector.broadcast %27 : vector<1x128xf32> to vector<256x128xf32>
    %29 = arith.addf %26, %28 : vector<256x128xf32>
    %30 = arith.addf %2, %29 : vector<256x128xf32>
    %c0_11 = arith.constant 0 : index
    %c0_12 = arith.constant 0 : index
    %31 = vector.load %arg7[%c0_11, %c0_12] : memref<256x128xf32, #tpu.memory_space<vmem>>, vector<256x128xf32>
    tpu.vector_store %arg7[%c0_11, %c0_12], %30 {strides = array<i32>} : memref<256x128xf32, #tpu.memory_space<vmem>>, vector<256x128xf32>,
    return
  }
  func.func @transform_0(%arg0: i32, %arg1: i32) -> i32 {
    %c0_i32 = arith.constant 0 : i32
    %c0_i32_0 = arith.constant 0 : i32
    return %c0_i32 : i32
  }
  func.func @transform_1(%arg0: i32, %arg1: i32) -> i32 {
    %c0_i32 = arith.constant 0 : i32
    %c0_i32_0 = arith.constant 0 : i32
    return %c0_i32 : i32
  }
  func.func @transform_2(%arg0: i32, %arg1: i32) -> (i32, i32) {
    %c0_i32 = arith.constant 0 : i32
    %c0_i32_0 = arith.constant 0 : i32
    return %arg0, %c0_i32 : i32, i32
  }
  func.func @transform_3(%arg0: i32, %arg1: i32) -> (i32, i32) {
    %c0_i32 = arith.constant 0 : i32
    %c0_i32_0 = arith.constant 0 : i32
    return %c0_i32, %arg1 : i32, i32
  }
  func.func @transform_4(%arg0: i32, %arg1: i32) -> (i32, i32) {
    %c0_i32 = arith.constant 0 : i32
    %c0_i32_0 = arith.constant 0 : i32
    return %c0_i32, %arg1 : i32, i32
  }
  func.func @transform_5(%arg0: i32, %arg1: i32) -> (i32, i32) {
    %c0_i32 = arith.constant 0 : i32
    return %arg0, %arg1 : i32, i32
  }
}

</mosaic_0001>

<llo_original>
// kernel: tpu_custom_call.1
$region0: #{tpu_custom_call.1}
  #allocation0 [shape = 'u32[]', space=smem, size = 0x4, offset = 0x4, fixed_abs, tag = 'smem constant byte address 0x4 - core index']
  #allocation1 [shape = 'u32[72,128]{1,0:T(1,128)}', space=vmem, size = 0x9000, scoped, tag = 'internal scratch']
  #allocation2 [shape = 's32[1]{0:T(128)S(6)}', space=smem, size = 0x200, scoped, tag = 'scoped memory for tpu_custom_call.1']
  %s0 = inlined_call_operand.<no memory space> [shape: s32[1], index: 0, kind: input, shape index: {}]
  %s1 = inlined_call_operand.vmem [shape: f32[2], index: 1, kind: input, shape index: {}]
  %s2 = inlined_call_operand.hbm [shape: f32[512,128], index: 2, kind: input, shape index: {}]
  %s3 = inlined_call_operand.hbm [shape: bf16[128,128], index: 3, kind: input, shape index: {}]
  %s4 = inlined_call_operand.vmem [shape: f32[1,128], index: 4, kind: input, shape index: {}]
  %s5 = inlined_call_operand.hbm [shape: f32[512,128], index: 5, kind: output, shape index: {}]
  %s6 = sld [smem:[#allocation0]]
  $region65: #{tpu_custom_call.1} parent=0
    _
  %s8 = ssub.s32 1, %s6
  %s9 = scalar_select 0, %s8, %s6
  %10 = sst [smem:[#allocation2]] %s0
  $region1: #{tpu_custom_call.1} parent=0
    #allocation3 [shape = 'u8[512]{0}', space=smem, size = 0x200, scoped, tag = 'input window, operand 1, single buffered']
    #allocation4 [shape = 's32[2]{0}', space=sflag, size = 0x8, scoped, tag = 'scoped memory for tpu_custom_call.1']
    #allocation5 [shape = 's32[2]{0}', space=sflag, size = 0x8, scoped, tag = 'scoped memory for tpu_custom_call.1']
    #allocation6 [shape = 's32[2]{0}', space=sflag, size = 0x8, scoped, tag = 'scoped memory for tpu_custom_call.1']
    #allocation7 [shape = 'u8[262144]{0}', space=vmem, size = 0x40000, scoped, tag = 'input window, operand 2']
    #allocation8 [shape = 'u8[32768]{0}', space=vmem, size = 0x8000, scoped, tag = 'input window, operand 3, single buffered']
    #allocation9 [shape = 's32[1]{0}', space=sflag, size = 0x4, scoped, tag = 'scoped memory for tpu_custom_call.1']
    #allocation10 [shape = 'u8[262144]{0}', space=vmem, size = 0x40000, scoped, tag = 'output window, operand 0']
    %11 = vsyncpa [#allocation6], 0
    %12 = vsyncpa [#allocation4], 0
    %s13 = scalar_lea.sflag [#allocation4], 1
    %14 = vsyncpa %s13, 0
    %15 = vsyncpa [#allocation9], 0
    %16 = vsyncpa [#allocation5], 0
    %s17 = scalar_lea.sflag [#allocation5], 1
    %18 = vsyncpa %s17, 0
    loop: start=0, step=1, limit=4
    $region2: #{tpu_custom_call.1} parent=1 // loop_pre_header
      _
    $region3: #{tpu_custom_call.1} parent=1 // loop_header
      %s20 = sphi 0, %s24
      %p21 = scmp.ge.s32.totalorder %s20, 4
      %s27 = sphi 0, %s39
      %s28 = sphi 0, %s35
      %s29 = sphi 0, %s27
      %s30 = sphi 0, %s28
      %s31 = sphi 0, %s29
      %s32 = sphi 0, %s30
      %s40 = sphi 0, %s40
      %s42 = sphi 0, %s40
      %s43 = sphi 0, %s42
      %s57 = sphi 0, %s43
      %s61 = sphi 0, %s61
      %s63 = sphi 0, %s61
      %s64 = sphi 0, %s63
      %s78 = sphi 0, %s64
      %s84 = sphi 0, %s86
      %s87 = sphi 0, %s84
      %s88 = sphi 0, %s87
      %s104 = sphi 0, %s88
      %s110 = sphi 0, %s112
      %s113 = sphi 0, %s110
      %s114 = sphi 0, %s113
      %s130 = sphi 0, %s114
      %s136 = sphi 0, %s138
      %s139 = sphi 0, %s136
      %s140 = sphi 0, %s139
      %s156 = sphi 0, %s140
      %s164 = sphi 0, %s166
      %s167 = sphi 0, %s164
      %s168 = sphi 0, %s167
      %s184 = sphi 0, %s168
    $region4: #{tpu_custom_call.1} parent=1 // loop_header_branch
      %23 = sbr.rel (%p21) target = $region8
    $region5: #{tpu_custom_call.1} parent=1 // loop_body
      %s25 = ssub.s32 %s20, 1
      %s26 = ssub.s32 %s20, 2
      %s33 = sadd.s32 1, %s28
      %p34 = scmp.ge.s32.totalorder %s33, 1
      %s35 = scalar_select %p34, 0, %s33
      %s36 = sadd.s32 1, %s27
      %s37 = scalar_select %p34, %s36, %s27
      %p38 = scmp.ge.s32.totalorder %s37, 2
      %s39 = scalar_select %p38, 0, %s37
      %s41 = sadd.s32 %s40, 1
      %p44 = scmp.eq.s32.totalorder %s20, 1
      %p45 = scmp.ne.s32.totalorder %s40, %s42
      %p46 = scmp.eq.s32.totalorder %s20, 0
      %p47 = por %p45, %p46
      %p48 = scmp.ne.s32.totalorder %s40, %s42
      %p49 = scmp.eq.s32.totalorder %s25, 1
      %p50 = por %p48, %p49
      %p51 = scmp.ne.s32.totalorder %s42, %s43
      %p52 = scmp.eq.s32.totalorder %s25, 0
      %p53 = por %p51, %p52
      %p54 = scmp.ne.s32.totalorder %s42, %s43
      %p55 = scmp.eq.s32.totalorder %s26, 1
      %p56 = por %p54, %p55
      %p58 = scmp.ne.s32.totalorder %s43, %s57
      %p59 = scmp.eq.s32.totalorder %s26, 0
      %p60 = por %p58, %p59
      %s62 = sadd.s32 %s61, 1
      %p65 = scmp.eq.s32.totalorder %s20, 1
      %p66 = scmp.ne.s32.totalorder %s61, %s63
      %p67 = scmp.eq.s32.totalorder %s20, 0
      %p68 = por %p66, %p67
      %p69 = scmp.ne.s32.totalorder %s61, %s63
      %p70 = scmp.eq.s32.totalorder %s25, 1
      %p71 = por %p69, %p70
      %p72 = scmp.ne.s32.totalorder %s63, %s64
      %p73 = scmp.eq.s32.totalorder %s25, 0
      %p74 = por %p72, %p73
      %p75 = scmp.ne.s32.totalorder %s63, %s64
      %p76 = scmp.eq.s32.totalorder %s26, 1
      %p77 = por %p75, %p76
      %p79 = scmp.ne.s32.totalorder %s64, %s78
      %p80 = scmp.eq.s32.totalorder %s26, 0
      %p81 = por %p79, %p80
      %s82 = ssub.s32 %s27, %s39
      %p83 = scmp.eq.s32.totalorder %s82, 0
      %s85 = sadd.s32 %s84, 1
      %s86 = scalar_select %p83, %s84, %s85
      %p89 = pneg %p83
      %p90 = scmp.eq.s32.totalorder %s20, 1
      %p91 = por %p89, %p90
      %p92 = scmp.ne.s32.totalorder %s84, %s87
      %p93 = scmp.eq.s32.totalorder %s20, 0
      %p94 = por %p92, %p93
      %p95 = scmp.ne.s32.totalorder %s84, %s87
      %p96 = scmp.eq.s32.totalorder %s25, 1
      %p97 = por %p95, %p96
      %p98 = scmp.ne.s32.totalorder %s87, %s88
      %p99 = scmp.eq.s32.totalorder %s25, 0
      %p100 = por %p98, %p99
      %p101 = scmp.ne.s32.totalorder %s87, %s88
      %p102 = scmp.eq.s32.totalorder %s26, 1
      %p103 = por %p101, %p102
      %p105 = scmp.ne.s32.totalorder %s88, %s104
      %p106 = scmp.eq.s32.totalorder %s26, 0
      %p107 = por %p105, %p106
      %s108 = ssub.s32 %s28, %s35
      %p109 = scmp.eq.s32.totalorder %s108, 0
      %s111 = sadd.s32 %s110, 1
      %s112 = scalar_select %p109, %s110, %s111
      %p115 = pneg %p109
      %p116 = scmp.eq.s32.totalorder %s20, 1
      %p117 = por %p115, %p116
      %p118 = scmp.ne.s32.totalorder %s110, %s113
      %p119 = scmp.eq.s32.totalorder %s20, 0
      %p120 = por %p118, %p119
      %p121 = scmp.ne.s32.totalorder %s110, %s113
      %p122 = scmp.eq.s32.totalorder %s25, 1
      %p123 = por %p121, %p122
      %p124 = scmp.ne.s32.totalorder %s113, %s114
      %p125 = scmp.eq.s32.totalorder %s25, 0
      %p126 = por %p124, %p125
      %p127 = scmp.ne.s32.totalorder %s113, %s114
      %p128 = scmp.eq.s32.totalorder %s26, 1
      %p129 = por %p127, %p128
      %p131 = scmp.ne.s32.totalorder %s114, %s130
      %p132 = scmp.eq.s32.totalorder %s26, 0
      %p133 = por %p131, %p132
      %s134 = ssub.s32 %s28, %s35
      %p135 = scmp.eq.s32.totalorder %s134, 0
      %s137 = sadd.s32 %s136, 1
      %s138 = scalar_select %p135, %s136, %s137
      %p141 = pneg %p135
      %p142 = scmp.eq.s32.totalorder %s20, 1
      %p143 = por %p141, %p142
      %p144 = scmp.ne.s32.totalorder %s136, %s139
      %p145 = scmp.eq.s32.totalorder %s20, 0
      %p146 = por %p144, %p145
      %p147 = scmp.ne.s32.totalorder %s136, %s139
      %p148 = scmp.eq.s32.totalorder %s25, 1
      %p149 = por %p147, %p148
      %p150 = scmp.ne.s32.totalorder %s139, %s140
      %p151 = scmp.eq.s32.totalorder %s25, 0
      %p152 = por %p150, %p151
      %p153 = scmp.ne.s32.totalorder %s139, %s140
      %p154 = scmp.eq.s32.totalorder %s26, 1
      %p155 = por %p153, %p154
      %p157 = scmp.ne.s32.totalorder %s140, %s156
      %p158 = scmp.eq.s32.totalorder %s26, 0
      %p159 = por %p157, %p158
      %s160 = ssub.s32 %s27, %s39
      %s161 = ssub.s32 %s28, %s35
      %s162 = sor.u32 %s160, %s161
      %p163 = scmp.eq.s32.totalorder %s162, 0
      %s165 = sadd.s32 %s164, 1
      %s166 = scalar_select %p163, %s164, %s165
      %p169 = pneg %p163
      %p170 = scmp.eq.s32.totalorder %s20, 1
      %p171 = por %p169, %p170
      %p172 = scmp.ne.s32.totalorder %s164, %s167
      %p173 = scmp.eq.s32.totalorder %s20, 0
      %p174 = por %p172, %p173
      %p175 = scmp.ne.s32.totalorder %s164, %s167
      %p176 = scmp.eq.s32.totalorder %s25, 1
      %p177 = por %p175, %p176
      %p178 = scmp.ne.s32.totalorder %s167, %s168
      %p179 = scmp.eq.s32.totalorder %s25, 0
      %p180 = por %p178, %p179
      %p181 = scmp.ne.s32.totalorder %s167, %s168
      %p182 = scmp.eq.s32.totalorder %s26, 1
      %p183 = por %p181, %p182
      %p185 = scmp.ne.s32.totalorder %s168, %s184
      %p186 = scmp.eq.s32.totalorder %s26, 0
      %p187 = por %p185, %p186
      %p188 = scmp.le.s32.totalorder 1, %s20
      %p189 = scmp.lt.s32.totalorder %s20, 3
      %p190 = pnand %p188, %p189
      %p191 = pneg %p190
      // Predicated region
      $region9: #{tpu_custom_call.1} parent=5 // pred_check
        _
      $region10: #{tpu_custom_call.1} parent=5 // pred_check_branch
        %193 = sbr.rel (%p190) target = $region12
      $region11: #{tpu_custom_call.1} parent=5 // pred_region
        %s194 = ssub.s32 %s20, 1
        // Predicated region
        $region13: #{tpu_custom_call.1} parent=11 // pred_check
          %p195 = pneg %p53
        $region14: #{tpu_custom_call.1} parent=11 // pred_check_branch
          %197 = sbr.rel (%p195) target = $region16
        $region15: #{tpu_custom_call.1} parent=11 // pred_region
          _
        $region16: #{tpu_custom_call.1} parent=11 // pred_fallthru
          _
        // Predicated region
        $region17: #{tpu_custom_call.1} parent=11 // pred_check
          %p198 = pneg %p74
        $region18: #{tpu_custom_call.1} parent=11 // pred_check_branch
          %200 = sbr.rel (%p198) target = $region20
        $region19: #{tpu_custom_call.1} parent=11 // pred_region
          %202 = vsyncadd [#allocation6], 0
          %s204 = sshll.u32 %s1, 4
          %s205 = int_to_ptr.vmem [resolvable:$true] %s204
          %207 = dma.vmem_to_smem %s205, 16, [#allocation3], [#allocation6]
        $region20: #{tpu_custom_call.1} parent=11 // pred_fallthru
          _
        // Predicated region
        $region21: #{tpu_custom_call.1} parent=11 // pred_check
          %p208 = pneg %p126
        $region22: #{tpu_custom_call.1} parent=11 // pred_check_branch
          %210 = sbr.rel (%p208) target = $region24
        $region23: #{tpu_custom_call.1} parent=11 // pred_region
          %212 = vsyncadd [#allocation9], 0
          %s213 = smul.addr %s30, 4
          %s214 = scalar_lea.hbm %s3, %s213
          %s215 = sshll.u32 %s214, 4
          %s216 = int_to_ptr.hbm [resolvable:$true] %s215
          %s217 = sshll.u32 [#allocation8], 4
          %s218 = int_to_ptr.vmem [resolvable:$true] %s217
          %223 = dma.hbm_to_vmem [thread:$0]  %s216, 1024, %s218, [#allocation9], 64, 64, 4
        $region24: #{tpu_custom_call.1} parent=11 // pred_fallthru
          _
        // Predicated region
        $region25: #{tpu_custom_call.1} parent=11 // pred_check
          %p224 = pneg %p152
        $region26: #{tpu_custom_call.1} parent=11 // pred_check_branch
          %226 = sbr.rel (%p224) target = $region28
        $region27: #{tpu_custom_call.1} parent=11 // pred_region
          %p227 = scmp.lt.s32.totalorder %s30, 0
          %s228 = scalar_select %p227, %s30, 0
          %s229 = scalar_lea.vmem %s4, %s228
        $region28: #{tpu_custom_call.1} parent=11 // pred_fallthru
          _
      $region12: #{tpu_custom_call.1} parent=5 // pred_fallthru
        _
      %p230 = scmp.lt.s32.totalorder %s20, 2
      // Predicated region
      $region29: #{tpu_custom_call.1} parent=5 // pred_check
        %p231 = pneg %p230
      $region30: #{tpu_custom_call.1} parent=5 // pred_check_branch
        %233 = sbr.rel (%p231) target = $region32
      $region31: #{tpu_custom_call.1} parent=5 // pred_region
        // Predicated region
        $region33: #{tpu_custom_call.1} parent=31 // pred_check
          %p234 = pneg %p94
        $region34: #{tpu_custom_call.1} parent=31 // pred_check_branch
          %236 = sbr.rel (%p234) target = $region36
        $region35: #{tpu_custom_call.1} parent=31 // pred_region
          %s237 = sand.u32 %s84, 1
          %s238 = scalar_lea.sflag [#allocation4], %s237
          %s239 = sand.u32 %s84, 1
          %s240 = smul.addr %s239, 256
          %s241 = scalar_lea.vmem [#allocation7], %s240
          %s242 = smul.u32 32, %s27
          %244 = vsyncadd %s238, 0
          %s245 = smul.addr %s242, 8
          %s246 = scalar_lea.hbm %s2, %s245
          %s247 = sshll.u32 %s246, 4
          %s248 = int_to_ptr.hbm [resolvable:$true] %s247
          %s249 = sshll.u32 %s241, 4
          %s250 = int_to_ptr.vmem [resolvable:$true] %s249
          %255 = dma.hbm_to_vmem [thread:$0]  %s248, 4096, %s250, %s238, 128, 128, 8
        $region36: #{tpu_custom_call.1} parent=31 // pred_fallthru
          _
      $region32: #{tpu_custom_call.1} parent=5 // pred_fallthru
        _
      %p256 = scmp.le.s32.totalorder 1, %s20
      %p257 = scmp.lt.s32.totalorder %s20, 3
      %p258 = pnand %p256, %p257
      %p259 = pneg %p258
      // Predicated region
      $region37: #{tpu_custom_call.1} parent=5 // pred_check
        _
      $region38: #{tpu_custom_call.1} parent=5 // pred_check_branch
        %261 = sbr.rel (%p258) target = $region40
      $region39: #{tpu_custom_call.1} parent=5 // pred_region
        %s262 = ssub.s32 %s20, 1
        // Predicated region
        $region41: #{tpu_custom_call.1} parent=39 // pred_check
          %p263 = pneg %p74
        $region42: #{tpu_custom_call.1} parent=39 // pred_check_branch
          %265 = sbr.rel (%p263) target = $region44
        $region43: #{tpu_custom_call.1} parent=39 // pred_region
          %267 = dma.done [#allocation6], 16
        $region44: #{tpu_custom_call.1} parent=39 // pred_fallthru
          _
        %s268 = sand.u32 %s87, 1
        %s269 = scalar_lea.sflag [#allocation4], %s268
        %s270 = sand.u32 %s87, 1
        %s271 = smul.addr %s270, 256
        %s272 = scalar_lea.vmem [#allocation7], %s271
        // Predicated region
        $region45: #{tpu_custom_call.1} parent=39 // pred_check
          %p273 = pneg %p100
        $region46: #{tpu_custom_call.1} parent=39 // pred_check_branch
          %275 = sbr.rel (%p273) target = $region48
        $region47: #{tpu_custom_call.1} parent=39 // pred_region
          %277 = dma.done %s269, 4096
        $region48: #{tpu_custom_call.1} parent=39 // pred_fallthru
          _
        // Predicated region
        $region49: #{tpu_custom_call.1} parent=39 // pred_check
          %p278 = pneg %p126
        $region50: #{tpu_custom_call.1} parent=39 // pred_check_branch
          %280 = sbr.rel (%p278) target = $region52
        $region51: #{tpu_custom_call.1} parent=39 // pred_region
          %282 = dma.done [#allocation9], 1024
        $region52: #{tpu_custom_call.1} parent=39 // pred_fallthru
          _
        %283 = sfence
        %p284 = pneg %p53
        %p285 = pneg %p50
        %p286 = pneg %p74
        %p287 = pneg %p71
        %s288 = sand.u32 %s87, 1
        %s289 = scalar_lea.sflag [#allocation4], %s288
        %s290 = sand.u32 %s87, 1
        %s291 = smul.addr %s290, 256
        %s292 = scalar_lea.vmem [#allocation7], %s291
        %p293 = pneg %p100
        %p294 = pneg %p97
        %p295 = pneg %p126
        %p296 = pneg %p123
        %p297 = scmp.lt.s32.totalorder %s30, 0
        %s298 = scalar_select %p297, %s30, 0
        %s299 = scalar_lea.vmem %s4, %s298
        %p300 = pneg %p152
        %p301 = pneg %p149
        %p302 = pneg %p180
        %p303 = pneg %p177
        %s304 = sand.u32 %s167, 1
        %s305 = scalar_lea.sflag [#allocation5], %s304
        %s306 = sand.u32 %s167, 1
        %s307 = smul.addr %s306, 256
        %s308 = scalar_lea.vmem [#allocation10], %s307
        %s309 = smul.u32 32, %s29
        %p310 = scmp.lt.s32.totalorder %s30, 0
        %s311 = scalar_select %p310, %s30, 0
        %s312 = scalar_lea.vmem %s4, %s311
        %s313 = smul.u32 32, %s29
        %s314 = sld [smem:[#allocation3]]
        %s315 = sld [smem:[#allocation3 + $0x1]]
        %v316 = vld [vmem:[%s272] sm:$0xff]
        %v317 = vld [vmem:[%s272 + $0x8] sm:$0xff]
        %v318 = vld [vmem:[%s272 + $0x10] sm:$0xff]
        %v319 = vld [vmem:[%s272 + $0x18] sm:$0xff]
        %v320 = vld [vmem:[%s272 + $0x20] sm:$0xff]
        %v321 = vld [vmem:[%s272 + $0x28] sm:$0xff]
        %v322 = vld [vmem:[%s272 + $0x30] sm:$0xff]
        %v323 = vld [vmem:[%s272 + $0x38] sm:$0xff]
        %v324 = vld [vmem:[%s272 + $0x40] sm:$0xff]
        %v325 = vld [vmem:[%s272 + $0x48] sm:$0xff]
        %v326 = vld [vmem:[%s272 + $0x50] sm:$0xff]
        %v327 = vld [vmem:[%s272 + $0x58] sm:$0xff]
        %v328 = vld [vmem:[%s272 + $0x60] sm:$0xff]
        %v329 = vld [vmem:[%s272 + $0x68] sm:$0xff]
        %v330 = vld [vmem:[%s272 + $0x70] sm:$0xff]
        %v331 = vld [vmem:[%s272 + $0x78] sm:$0xff]
        %v332 = vld [vmem:[%s272 + $0x80] sm:$0xff]
        %v333 = vld [vmem:[%s272 + $0x88] sm:$0xff]
        %v334 = vld [vmem:[%s272 + $0x90] sm:$0xff]
        %v335 = vld [vmem:[%s272 + $0x98] sm:$0xff]
        %v336 = vld [vmem:[%s272 + $0xa0] sm:$0xff]
        %v337 = vld [vmem:[%s272 + $0xa8] sm:$0xff]
        %v338 = vld [vmem:[%s272 + $0xb0] sm:$0xff]
        %v339 = vld [vmem:[%s272 + $0xb8] sm:$0xff]
        %v340 = vld [vmem:[%s272 + $0xc0] sm:$0xff]
        %v341 = vld [vmem:[%s272 + $0xc8] sm:$0xff]
        %v342 = vld [vmem:[%s272 + $0xd0] sm:$0xff]
        %v343 = vld [vmem:[%s272 + $0xd8] sm:$0xff]
        %v344 = vld [vmem:[%s272 + $0xe0] sm:$0xff]
        %v345 = vld [vmem:[%s272 + $0xe8] sm:$0xff]
        %v346 = vld [vmem:[%s272 + $0xf0] sm:$0xff]
        %v347 = vld [vmem:[%s272 + $0xf8] sm:$0xff]
        %348 = vadd.xlane.f32.xlu0 %v316
        %v349 = vpop.xlane.xlu0 %348
        %350 = vadd.xlane.f32.xlu0 %v317
        %v351 = vpop.xlane.xlu0 %350
        %352 = vadd.xlane.f32.xlu0 %v318
        %v353 = vpop.xlane.xlu0 %352
        %354 = vadd.xlane.f32.xlu0 %v319
        %v355 = vpop.xlane.xlu0 %354
        %356 = vadd.xlane.f32.xlu0 %v320
        %v357 = vpop.xlane.xlu0 %356
        %358 = vadd.xlane.f32.xlu0 %v321
        %v359 = vpop.xlane.xlu0 %358
        %360 = vadd.xlane.f32.xlu0 %v322
        %v361 = vpop.xlane.xlu0 %360
        %362 = vadd.xlane.f32.xlu0 %v323
        %v363 = vpop.xlane.xlu0 %362
        %364 = vadd.xlane.f32.xlu0 %v324
        %v365 = vpop.xlane.xlu0 %364
        %366 = vadd.xlane.f32.xlu0 %v325
        %v367 = vpop.xlane.xlu0 %366
        %368 = vadd.xlane.f32.xlu0 %v326
        %v369 = vpop.xlane.xlu0 %368
        %370 = vadd.xlane.f32.xlu0 %v327
        %v371 = vpop.xlane.xlu0 %370
        %372 = vadd.xlane.f32.xlu0 %v328
        %v373 = vpop.xlane.xlu0 %372
        %374 = vadd.xlane.f32.xlu0 %v329
        %v375 = vpop.xlane.xlu0 %374
        %376 = vadd.xlane.f32.xlu0 %v330
        %v377 = vpop.xlane.xlu0 %376
        %378 = vadd.xlane.f32.xlu0 %v331
        %v379 = vpop.xlane.xlu0 %378
        %380 = vadd.xlane.f32.xlu0 %v332
        %v381 = vpop.xlane.xlu0 %380
        %382 = vadd.xlane.f32.xlu0 %v333
        %v383 = vpop.xlane.xlu0 %382
        %384 = vadd.xlane.f32.xlu0 %v334
        %v385 = vpop.xlane.xlu0 %384
        %386 = vadd.xlane.f32.xlu0 %v335
        %v387 = vpop.xlane.xlu0 %386
        %388 = vadd.xlane.f32.xlu0 %v336
        %v389 = vpop.xlane.xlu0 %388
        %390 = vadd.xlane.f32.xlu0 %v337
        %v391 = vpop.xlane.xlu0 %390
        %392 = vadd.xlane.f32.xlu0 %v338
        %v393 = vpop.xlane.xlu0 %392
        %394 = vadd.xlane.f32.xlu0 %v339
        %v395 = vpop.xlane.xlu0 %394
        %396 = vadd.xlane.f32.xlu0 %v340
        %v397 = vpop.xlane.xlu0 %396
        %398 = vadd.xlane.f32.xlu0 %v341
        %v399 = vpop.xlane.xlu0 %398
        %400 = vadd.xlane.f32.xlu0 %v342
        %v401 = vpop.xlane.xlu0 %400
        %402 = vadd.xlane.f32.xlu0 %v343
        %v403 = vpop.xlane.xlu0 %402
        %404 = vadd.xlane.f32.xlu0 %v344
        %v405 = vpop.xlane.xlu0 %404
        %406 = vadd.xlane.f32.xlu0 %v345
        %v407 = vpop.xlane.xlu0 %406
        %408 = vadd.xlane.f32.xlu0 %v346
        %v409 = vpop.xlane.xlu0 %408
        %410 = vadd.xlane.f32.xlu0 %v347
        %v411 = vpop.xlane.xlu0 %410
        %v412 = vrcp.pop 128.0
        %v413 = vmul.f32 128.0, %v412
        %v414 = vsub.f32 1.0, %v413
        %v415 = vmul.f32 %v412, %v414
        %v416 = vadd.f32 %v412, %v415
        %vm417 = vweird.f32 %v412
        %v418 = vsel %vm417, %v412, %v416
        %v419 = vmul.f32 %v349, %v418
        %v420 = vmul.f32 %v351, %v418
        %v421 = vmul.f32 %v353, %v418
        %v422 = vmul.f32 %v355, %v418
        %v423 = vmul.f32 %v357, %v418
        %v424 = vmul.f32 %v359, %v418
        %v425 = vmul.f32 %v361, %v418
        %v426 = vmul.f32 %v363, %v418
        %v427 = vmul.f32 %v365, %v418
        %v428 = vmul.f32 %v367, %v418
        %v429 = vmul.f32 %v369, %v418
        %v430 = vmul.f32 %v371, %v418
        %v431 = vmul.f32 %v373, %v418
        %v432 = vmul.f32 %v375, %v418
        %v433 = vmul.f32 %v377, %v418
        %v434 = vmul.f32 %v379, %v418
        %v435 = vmul.f32 %v381, %v418
        %v436 = vmul.f32 %v383, %v418
        %v437 = vmul.f32 %v385, %v418
        %v438 = vmul.f32 %v387, %v418
        %v439 = vmul.f32 %v389, %v418
        %v440 = vmul.f32 %v391, %v418
        %v441 = vmul.f32 %v393, %v418
        %v442 = vmul.f32 %v395, %v418
        %v443 = vmul.f32 %v397, %v418
        %v444 = vmul.f32 %v399, %v418
        %v445 = vmul.f32 %v401, %v418
        %v446 = vmul.f32 %v403, %v418
        %v447 = vmul.f32 %v405, %v418
        %v448 = vmul.f32 %v407, %v418
        %v449 = vmul.f32 %v409, %v418
        %v450 = vmul.f32 %v411, %v418
        %v451 = vsub.f32 %v316, %v419
        %v452 = vsub.f32 %v317, %v420
        %v453 = vsub.f32 %v318, %v421
        %v454 = vsub.f32 %v319, %v422
        %v455 = vsub.f32 %v320, %v423
        %v456 = vsub.f32 %v321, %v424
        %v457 = vsub.f32 %v322, %v425
        %v458 = vsub.f32 %v323, %v426
        %v459 = vsub.f32 %v324, %v427
        %v460 = vsub.f32 %v325, %v428
        %v461 = vsub.f32 %v326, %v429
        %v462 = vsub.f32 %v327, %v430
        %v463 = vsub.f32 %v328, %v431
        %v464 = vsub.f32 %v329, %v432
        %v465 = vsub.f32 %v330, %v433
        %v466 = vsub.f32 %v331, %v434
        %v467 = vsub.f32 %v332, %v435
        %v468 = vsub.f32 %v333, %v436
        %v469 = vsub.f32 %v334, %v437
        %v470 = vsub.f32 %v335, %v438
        %v471 = vsub.f32 %v336, %v439
        %v472 = vsub.f32 %v337, %v440
        %v473 = vsub.f32 %v338, %v441
        %v474 = vsub.f32 %v339, %v442
        %v475 = vsub.f32 %v340, %v443
        %v476 = vsub.f32 %v341, %v444
        %v477 = vsub.f32 %v342, %v445
        %v478 = vsub.f32 %v343, %v446
        %v479 = vsub.f32 %v344, %v447
        %v480 = vsub.f32 %v345, %v448
        %v481 = vsub.f32 %v346, %v449
        %v482 = vsub.f32 %v347, %v450
        %v483 = vmul.f32 %v451, %v451
        %v484 = vmul.f32 %v452, %v452
        %v485 = vmul.f32 %v453, %v453
        %v486 = vmul.f32 %v454, %v454
        %v487 = vmul.f32 %v455, %v455
        %v488 = vmul.f32 %v456, %v456
        %v489 = vmul.f32 %v457, %v457
        %v490 = vmul.f32 %v458, %v458
        %v491 = vmul.f32 %v459, %v459
        %v492 = vmul.f32 %v460, %v460
        %v493 = vmul.f32 %v461, %v461
        %v494 = vmul.f32 %v462, %v462
        %v495 = vmul.f32 %v463, %v463
        %v496 = vmul.f32 %v464, %v464
        %v497 = vmul.f32 %v465, %v465
        %v498 = vmul.f32 %v466, %v466
        %v499 = vmul.f32 %v467, %v467
        %v500 = vmul.f32 %v468, %v468
        %v501 = vmul.f32 %v469, %v469
        %v502 = vmul.f32 %v470, %v470
        %v503 = vmul.f32 %v471, %v471
        %v504 = vmul.f32 %v472, %v472
        %v505 = vmul.f32 %v473, %v473
        %v506 = vmul.f32 %v474, %v474
        %v507 = vmul.f32 %v475, %v475
        %v508 = vmul.f32 %v476, %v476
        %v509 = vmul.f32 %v477, %v477
        %v510 = vmul.f32 %v478, %v478
        %v511 = vmul.f32 %v479, %v479
        %v512 = vmul.f32 %v480, %v480
        %v513 = vmul.f32 %v481, %v481
        %v514 = vmul.f32 %v482, %v482
        %515 = vadd.xlane.f32.xlu0 %v483
        %v516 = vpop.xlane.xlu0 %515
        %517 = vadd.xlane.f32.xlu0 %v484
        %v518 = vpop.xlane.xlu0 %517
        %519 = vadd.xlane.f32.xlu0 %v485
        %v520 = vpop.xlane.xlu0 %519
        %521 = vadd.xlane.f32.xlu0 %v486
        %v522 = vpop.xlane.xlu0 %521
        %523 = vadd.xlane.f32.xlu0 %v487
        %v524 = vpop.xlane.xlu0 %523
        %525 = vadd.xlane.f32.xlu0 %v488
        %v526 = vpop.xlane.xlu0 %525
        %527 = vadd.xlane.f32.xlu0 %v489
        %v528 = vpop.xlane.xlu0 %527
        %529 = vadd.xlane.f32.xlu0 %v490
        %v530 = vpop.xlane.xlu0 %529
        %531 = vadd.xlane.f32.xlu0 %v491
        %v532 = vpop.xlane.xlu0 %531
        %533 = vadd.xlane.f32.xlu0 %v492
        %v534 = vpop.xlane.xlu0 %533
        %535 = vadd.xlane.f32.xlu0 %v493
        %v536 = vpop.xlane.xlu0 %535
        %537 = vadd.xlane.f32.xlu0 %v494
        %v538 = vpop.xlane.xlu0 %537
        %539 = vadd.xlane.f32.xlu0 %v495
        %v540 = vpop.xlane.xlu0 %539
        %541 = vadd.xlane.f32.xlu0 %v496
        %v542 = vpop.xlane.xlu0 %541
        %543 = vadd.xlane.f32.xlu0 %v497
        %v544 = vpop.xlane.xlu0 %543
        %545 = vadd.xlane.f32.xlu0 %v498
        %v546 = vpop.xlane.xlu0 %545
        %547 = vadd.xlane.f32.xlu0 %v499
        %v548 = vpop.xlane.xlu0 %547
        %549 = vadd.xlane.f32.xlu0 %v500
        %v550 = vpop.xlane.xlu0 %549
        %551 = vadd.xlane.f32.xlu0 %v501
        %v552 = vpop.xlane.xlu0 %551
        %553 = vadd.xlane.f32.xlu0 %v502
        %v554 = vpop.xlane.xlu0 %553
        %555 = vadd.xlane.f32.xlu0 %v503
        %v556 = vpop.xlane.xlu0 %555
        %557 = vadd.xlane.f32.xlu0 %v504
        %v558 = vpop.xlane.xlu0 %557
        %559 = vadd.xlane.f32.xlu0 %v505
        %v560 = vpop.xlane.xlu0 %559
        %561 = vadd.xlane.f32.xlu0 %v506
        %v562 = vpop.xlane.xlu0 %561
        %563 = vadd.xlane.f32.xlu0 %v507
        %v564 = vpop.xlane.xlu0 %563
        %565 = vadd.xlane.f32.xlu0 %v508
        %v566 = vpop.xlane.xlu0 %565
        %567 = vadd.xlane.f32.xlu0 %v509
        %v568 = vpop.xlane.xlu0 %567
        %569 = vadd.xlane.f32.xlu0 %v510
        %v570 = vpop.xlane.xlu0 %569
        %571 = vadd.xlane.f32.xlu0 %v511
        %v572 = vpop.xlane.xlu0 %571
        %573 = vadd.xlane.f32.xlu0 %v512
        %v574 = vpop.xlane.xlu0 %573
        %575 = vadd.xlane.f32.xlu0 %v513
        %v576 = vpop.xlane.xlu0 %575
        %577 = vadd.xlane.f32.xlu0 %v514
        %v578 = vpop.xlane.xlu0 %577
        %v579 = vmul.f32 %v516, 0.007874016
        %v580 = vmul.f32 %v518, 0.007874016
        %v581 = vmul.f32 %v520, 0.007874016
        %v582 = vmul.f32 %v522, 0.007874016
        %v583 = vmul.f32 %v524, 0.007874016
        %v584 = vmul.f32 %v526, 0.007874016
        %v585 = vmul.f32 %v528, 0.007874016
        %v586 = vmul.f32 %v530, 0.007874016
        %v587 = vmul.f32 %v532, 0.007874016
        %v588 = vmul.f32 %v534, 0.007874016
        %v589 = vmul.f32 %v536, 0.007874016
        %v590 = vmul.f32 %v538, 0.007874016
        %v591 = vmul.f32 %v540, 0.007874016
        %v592 = vmul.f32 %v542, 0.007874016
        %v593 = vmul.f32 %v544, 0.007874016
        %v594 = vmul.f32 %v546, 0.007874016
        %v595 = vmul.f32 %v548, 0.007874016
        %v596 = vmul.f32 %v550, 0.007874016
        %v597 = vmul.f32 %v552, 0.007874016
        %v598 = vmul.f32 %v554, 0.007874016
        %v599 = vmul.f32 %v556, 0.007874016
        %v600 = vmul.f32 %v558, 0.007874016
        %v601 = vmul.f32 %v560, 0.007874016
        %v602 = vmul.f32 %v562, 0.007874016
        %v603 = vmul.f32 %v564, 0.007874016
        %v604 = vmul.f32 %v566, 0.007874016
        %v605 = vmul.f32 %v568, 0.007874016
        %v606 = vmul.f32 %v570, 0.007874016
        %v607 = vmul.f32 %v572, 0.007874016
        %v608 = vmul.f32 %v574, 0.007874016
        %v609 = vmul.f32 %v576, 0.007874016
        %v610 = vmul.f32 %v578, 0.007874016
        %v611 = vrsqrt.pop %v579
        %v612 = vmul.f32 %v611, %v579
        %v613 = vmul.f32 %v612, %v611
        %v614 = vmul.f32 0.5, %v613
        %v615 = vsub.f32 1.5, %v614
        %v616 = vmul.f32 %v611, %v615
        %v617 = vmul.f32 %v579, %v616
        %vm618 = vcmp.eq.f32.partialorder %v579, inf
        %v619 = vsel %vm618, %v579, %v617
        %vm620 = vcmp.eq.f32.partialorder %v579, 0.0
        %v621 = vand.u32 %v579, 2147483648
        %v622 = vsel %vm620, %v621, %v619
        %v623 = vrsqrt.pop %v580
        %v624 = vmul.f32 %v623, %v580
        %v625 = vmul.f32 %v624, %v623
        %v626 = vmul.f32 0.5, %v625
        %v627 = vsub.f32 1.5, %v626
        %v628 = vmul.f32 %v623, %v627
        %v629 = vmul.f32 %v580, %v628
        %vm630 = vcmp.eq.f32.partialorder %v580, inf
        %v631 = vsel %vm630, %v580, %v629
        %vm632 = vcmp.eq.f32.partialorder %v580, 0.0
        %v633 = vand.u32 %v580, 2147483648
        %v634 = vsel %vm632, %v633, %v631
        %v635 = vrsqrt.pop %v581
        %v636 = vmul.f32 %v635, %v581
        %v637 = vmul.f32 %v636, %v635
        %v638 = vmul.f32 0.5, %v637
        %v639 = vsub.f32 1.5, %v638
        %v640 = vmul.f32 %v635, %v639
        %v641 = vmul.f32 %v581, %v640
        %vm642 = vcmp.eq.f32.partialorder %v581, inf
        %v643 = vsel %vm642, %v581, %v641
        %vm644 = vcmp.eq.f32.partialorder %v581, 0.0
        %v645 = vand.u32 %v581, 2147483648
        %v646 = vsel %vm644, %v645, %v643
        %v647 = vrsqrt.pop %v582
        %v648 = vmul.f32 %v647, %v582
        %v649 = vmul.f32 %v648, %v647
        %v650 = vmul.f32 0.5, %v649
        %v651 = vsub.f32 1.5, %v650
        %v652 = vmul.f32 %v647, %v651
        %v653 = vmul.f32 %v582, %v652
        %vm654 = vcmp.eq.f32.partialorder %v582, inf
        %v655 = vsel %vm654, %v582, %v653
        %vm656 = vcmp.eq.f32.partialorder %v582, 0.0
        %v657 = vand.u32 %v582, 2147483648
        %v658 = vsel %vm656, %v657, %v655
        %v659 = vrsqrt.pop %v583
        %v660 = vmul.f32 %v659, %v583
        %v661 = vmul.f32 %v660, %v659
        %v662 = vmul.f32 0.5, %v661
        %v663 = vsub.f32 1.5, %v662
        %v664 = vmul.f32 %v659, %v663
        %v665 = vmul.f32 %v583, %v664
        %vm666 = vcmp.eq.f32.partialorder %v583, inf
        %v667 = vsel %vm666, %v583, %v665
        %vm668 = vcmp.eq.f32.partialorder %v583, 0.0
        %v669 = vand.u32 %v583, 2147483648
        %v670 = vsel %vm668, %v669, %v667
        %v671 = vrsqrt.pop %v584
        %v672 = vmul.f32 %v671, %v584
        %v673 = vmul.f32 %v672, %v671
        %v674 = vmul.f32 0.5, %v673
        %v675 = vsub.f32 1.5, %v674
        %v676 = vmul.f32 %v671, %v675
        %v677 = vmul.f32 %v584, %v676
        %vm678 = vcmp.eq.f32.partialorder %v584, inf
        %v679 = vsel %vm678, %v584, %v677
        %vm680 = vcmp.eq.f32.partialorder %v584, 0.0
        %v681 = vand.u32 %v584, 2147483648
        %v682 = vsel %vm680, %v681, %v679
        %v683 = vrsqrt.pop %v585
        %v684 = vmul.f32 %v683, %v585
        %v685 = vmul.f32 %v684, %v683
        %v686 = vmul.f32 0.5, %v685
        %v687 = vsub.f32 1.5, %v686
        %v688 = vmul.f32 %v683, %v687
        %v689 = vmul.f32 %v585, %v688
        %vm690 = vcmp.eq.f32.partialorder %v585, inf
        %v691 = vsel %vm690, %v585, %v689
        %vm692 = vcmp.eq.f32.partialorder %v585, 0.0
        %v693 = vand.u32 %v585, 2147483648
        %v694 = vsel %vm692, %v693, %v691
        %v695 = vrsqrt.pop %v586
        %v696 = vmul.f32 %v695, %v586
        %v697 = vmul.f32 %v696, %v695
        %v698 = vmul.f32 0.5, %v697
        %v699 = vsub.f32 1.5, %v698
        %v700 = vmul.f32 %v695, %v699
        %v701 = vmul.f32 %v586, %v700
        %vm702 = vcmp.eq.f32.partialorder %v586, inf
        %v703 = vsel %vm702, %v586, %v701
        %vm704 = vcmp.eq.f32.partialorder %v586, 0.0
        %v705 = vand.u32 %v586, 2147483648
        %v706 = vsel %vm704, %v705, %v703
        %v707 = vrsqrt.pop %v587
        %v708 = vmul.f32 %v707, %v587
        %v709 = vmul.f32 %v708, %v707
        %v710 = vmul.f32 0.5, %v709
        %v711 = vsub.f32 1.5, %v710
        %v712 = vmul.f32 %v707, %v711
        %v713 = vmul.f32 %v587, %v712
        %vm714 = vcmp.eq.f32.partialorder %v587, inf
        %v715 = vsel %vm714, %v587, %v713
        %vm716 = vcmp.eq.f32.partialorder %v587, 0.0
        %v717 = vand.u32 %v587, 2147483648
        %v718 = vsel %vm716, %v717, %v715
        %v719 = vrsqrt.pop %v588
        %v720 = vmul.f32 %v719, %v588
        %v721 = vmul.f32 %v720, %v719
        %v722 = vmul.f32 0.5, %v721
        %v723 = vsub.f32 1.5, %v722
        %v724 = vmul.f32 %v719, %v723
        %v725 = vmul.f32 %v588, %v724
        %vm726 = vcmp.eq.f32.partialorder %v588, inf
        %v727 = vsel %vm726, %v588, %v725
        %vm728 = vcmp.eq.f32.partialorder %v588, 0.0
        %v729 = vand.u32 %v588, 2147483648
        %v730 = vsel %vm728, %v729, %v727
        %v731 = vrsqrt.pop %v589
        %v732 = vmul.f32 %v731, %v589
        %v733 = vmul.f32 %v732, %v731
        %v734 = vmul.f32 0.5, %v733
        %v735 = vsub.f32 1.5, %v734
        %v736 = vmul.f32 %v731, %v735
        %v737 = vmul.f32 %v589, %v736
        %vm738 = vcmp.eq.f32.partialorder %v589, inf
        %v739 = vsel %vm738, %v589, %v737
        %vm740 = vcmp.eq.f32.partialorder %v589, 0.0
        %v741 = vand.u32 %v589, 2147483648
        %v742 = vsel %vm740, %v741, %v739
        %v743 = vrsqrt.pop %v590
        %v744 = vmul.f32 %v743, %v590
        %v745 = vmul.f32 %v744, %v743
        %v746 = vmul.f32 0.5, %v745
        %v747 = vsub.f32 1.5, %v746
        %v748 = vmul.f32 %v743, %v747
        %v749 = vmul.f32 %v590, %v748
        %vm750 = vcmp.eq.f32.partialorder %v590, inf
        %v751 = vsel %vm750, %v590, %v749
        %vm752 = vcmp.eq.f32.partialorder %v590, 0.0
        %v753 = vand.u32 %v590, 2147483648
        %v754 = vsel %vm752, %v753, %v751
        %v755 = vrsqrt.pop %v591
        %v756 = vmul.f32 %v755, %v591
        %v757 = vmul.f32 %v756, %v755
        %v758 = vmul.f32 0.5, %v757
        %v759 = vsub.f32 1.5, %v758
        %v760 = vmul.f32 %v755, %v759
        %v761 = vmul.f32 %v591, %v760
        %vm762 = vcmp.eq.f32.partialorder %v591, inf
        %v763 = vsel %vm762, %v591, %v761
        %vm764 = vcmp.eq.f32.partialorder %v591, 0.0
        %v765 = vand.u32 %v591, 2147483648
        %v766 = vsel %vm764, %v765, %v763
        %v767 = vrsqrt.pop %v592
        %v768 = vmul.f32 %v767, %v592
        %v769 = vmul.f32 %v768, %v767
        %v770 = vmul.f32 0.5, %v769
        %v771 = vsub.f32 1.5, %v770
        %v772 = vmul.f32 %v767, %v771
        %v773 = vmul.f32 %v592, %v772
        %vm774 = vcmp.eq.f32.partialorder %v592, inf
        %v775 = vsel %vm774, %v592, %v773
        %vm776 = vcmp.eq.f32.partialorder %v592, 0.0
        %v777 = vand.u32 %v592, 2147483648
        %v778 = vsel %vm776, %v777, %v775
        %v779 = vrsqrt.pop %v593
        %v780 = vmul.f32 %v779, %v593
        %v781 = vmul.f32 %v780, %v779
        %v782 = vmul.f32 0.5, %v781
        %v783 = vsub.f32 1.5, %v782
        %v784 = vmul.f32 %v779, %v783
        %v785 = vmul.f32 %v593, %v784
        %vm786 = vcmp.eq.f32.partialorder %v593, inf
        %v787 = vsel %vm786, %v593, %v785
        %vm788 = vcmp.eq.f32.partialorder %v593, 0.0
        %v789 = vand.u32 %v593, 2147483648
        %v790 = vsel %vm788, %v789, %v787
        %v791 = vrsqrt.pop %v594
        %v792 = vmul.f32 %v791, %v594
        %v793 = vmul.f32 %v792, %v791
        %v794 = vmul.f32 0.5, %v793
        %v795 = vsub.f32 1.5, %v794
        %v796 = vmul.f32 %v791, %v795
        %v797 = vmul.f32 %v594, %v796
        %vm798 = vcmp.eq.f32.partialorder %v594, inf
        %v799 = vsel %vm798, %v594, %v797
        %vm800 = vcmp.eq.f32.partialorder %v594, 0.0
        %v801 = vand.u32 %v594, 2147483648
        %v802 = vsel %vm800, %v801, %v799
        %v803 = vrsqrt.pop %v595
        %v804 = vmul.f32 %v803, %v595
        %v805 = vmul.f32 %v804, %v803
        %v806 = vmul.f32 0.5, %v805
        %v807 = vsub.f32 1.5, %v806
        %v808 = vmul.f32 %v803, %v807
        %v809 = vmul.f32 %v595, %v808
        %vm810 = vcmp.eq.f32.partialorder %v595, inf
        %v811 = vsel %vm810, %v595, %v809
        %vm812 = vcmp.eq.f32.partialorder %v595, 0.0
        %v813 = vand.u32 %v595, 2147483648
        %v814 = vsel %vm812, %v813, %v811
        %v815 = vrsqrt.pop %v596
        %v816 = vmul.f32 %v815, %v596
        %v817 = vmul.f32 %v816, %v815
        %v818 = vmul.f32 0.5, %v817
        %v819 = vsub.f32 1.5, %v818
        %v820 = vmul.f32 %v815, %v819
        %v821 = vmul.f32 %v596, %v820
        %vm822 = vcmp.eq.f32.partialorder %v596, inf
        %v823 = vsel %vm822, %v596, %v821
        %vm824 = vcmp.eq.f32.partialorder %v596, 0.0
        %v825 = vand.u32 %v596, 2147483648
        %v826 = vsel %vm824, %v825, %v823
        %v827 = vrsqrt.pop %v597
        %v828 = vmul.f32 %v827, %v597
        %v829 = vmul.f32 %v828, %v827
        %v830 = vmul.f32 0.5, %v829
        %v831 = vsub.f32 1.5, %v830
        %v832 = vmul.f32 %v827, %v831
        %v833 = vmul.f32 %v597, %v832
        %vm834 = vcmp.eq.f32.partialorder %v597, inf
        %v835 = vsel %vm834, %v597, %v833
        %vm836 = vcmp.eq.f32.partialorder %v597, 0.0
        %v837 = vand.u32 %v597, 2147483648
        %v838 = vsel %vm836, %v837, %v835
        %v839 = vrsqrt.pop %v598
        %v840 = vmul.f32 %v839, %v598
        %v841 = vmul.f32 %v840, %v839
        %v842 = vmul.f32 0.5, %v841
        %v843 = vsub.f32 1.5, %v842
        %v844 = vmul.f32 %v839, %v843
        %v845 = vmul.f32 %v598, %v844
        %vm846 = vcmp.eq.f32.partialorder %v598, inf
        %v847 = vsel %vm846, %v598, %v845
        %vm848 = vcmp.eq.f32.partialorder %v598, 0.0
        %v849 = vand.u32 %v598, 2147483648
        %v850 = vsel %vm848, %v849, %v847
        %v851 = vrsqrt.pop %v599
        %v852 = vmul.f32 %v851, %v599
        %v853 = vmul.f32 %v852, %v851
        %v854 = vmul.f32 0.5, %v853
        %v855 = vsub.f32 1.5, %v854
        %v856 = vmul.f32 %v851, %v855
        %v857 = vmul.f32 %v599, %v856
        %vm858 = vcmp.eq.f32.partialorder %v599, inf
        %v859 = vsel %vm858, %v599, %v857
        %vm860 = vcmp.eq.f32.partialorder %v599, 0.0
        %v861 = vand.u32 %v599, 2147483648
        %v862 = vsel %vm860, %v861, %v859
        %v863 = vrsqrt.pop %v600
        %v864 = vmul.f32 %v863, %v600
        %v865 = vmul.f32 %v864, %v863
        %v866 = vmul.f32 0.5, %v865
        %v867 = vsub.f32 1.5, %v866
        %v868 = vmul.f32 %v863, %v867
        %v869 = vmul.f32 %v600, %v868
        %vm870 = vcmp.eq.f32.partialorder %v600, inf
        %v871 = vsel %vm870, %v600, %v869
        %vm872 = vcmp.eq.f32.partialorder %v600, 0.0
        %v873 = vand.u32 %v600, 2147483648
        %v874 = vsel %vm872, %v873, %v871
        %v875 = vrsqrt.pop %v601
        %v876 = vmul.f32 %v875, %v601
        %v877 = vmul.f32 %v876, %v875
        %v878 = vmul.f32 0.5, %v877
        %v879 = vsub.f32 1.5, %v878
        %v880 = vmul.f32 %v875, %v879
        %v881 = vmul.f32 %v601, %v880
        %vm882 = vcmp.eq.f32.partialorder %v601, inf
        %v883 = vsel %vm882, %v601, %v881
        %vm884 = vcmp.eq.f32.partialorder %v601, 0.0
        %v885 = vand.u32 %v601, 2147483648
        %v886 = vsel %vm884, %v885, %v883
        %v887 = vrsqrt.pop %v602
        %v888 = vmul.f32 %v887, %v602
        %v889 = vmul.f32 %v888, %v887
        %v890 = vmul.f32 0.5, %v889
        %v891 = vsub.f32 1.5, %v890
        %v892 = vmul.f32 %v887, %v891
        %v893 = vmul.f32 %v602, %v892
        %vm894 = vcmp.eq.f32.partialorder %v602, inf
        %v895 = vsel %vm894, %v602, %v893
        %vm896 = vcmp.eq.f32.partialorder %v602, 0.0
        %v897 = vand.u32 %v602, 2147483648
        %v898 = vsel %vm896, %v897, %v895
        %v899 = vrsqrt.pop %v603
        %v900 = vmul.f32 %v899, %v603
        %v901 = vmul.f32 %v900, %v899
        %v902 = vmul.f32 0.5, %v901
        %v903 = vsub.f32 1.5, %v902
        %v904 = vmul.f32 %v899, %v903
        %v905 = vmul.f32 %v603, %v904
        %vm906 = vcmp.eq.f32.partialorder %v603, inf
        %v907 = vsel %vm906, %v603, %v905
        %vm908 = vcmp.eq.f32.partialorder %v603, 0.0
        %v909 = vand.u32 %v603, 2147483648
        %v910 = vsel %vm908, %v909, %v907
        %v911 = vrsqrt.pop %v604
        %v912 = vmul.f32 %v911, %v604
        %v913 = vmul.f32 %v912, %v911
        %v914 = vmul.f32 0.5, %v913
        %v915 = vsub.f32 1.5, %v914
        %v916 = vmul.f32 %v911, %v915
        %v917 = vmul.f32 %v604, %v916
        %vm918 = vcmp.eq.f32.partialorder %v604, inf
        %v919 = vsel %vm918, %v604, %v917
        %vm920 = vcmp.eq.f32.partialorder %v604, 0.0
        %v921 = vand.u32 %v604, 2147483648
        %v922 = vsel %vm920, %v921, %v919
        %v923 = vrsqrt.pop %v605
        %v924 = vmul.f32 %v923, %v605
        %v925 = vmul.f32 %v924, %v923
        %v926 = vmul.f32 0.5, %v925
        %v927 = vsub.f32 1.5, %v926
        %v928 = vmul.f32 %v923, %v927
        %v929 = vmul.f32 %v605, %v928
        %vm930 = vcmp.eq.f32.partialorder %v605, inf
        %v931 = vsel %vm930, %v605, %v929
        %vm932 = vcmp.eq.f32.partialorder %v605, 0.0
        %v933 = vand.u32 %v605, 2147483648
        %v934 = vsel %vm932, %v933, %v931
        %v935 = vrsqrt.pop %v606
        %v936 = vmul.f32 %v935, %v606
        %v937 = vmul.f32 %v936, %v935
        %v938 = vmul.f32 0.5, %v937
        %v939 = vsub.f32 1.5, %v938
        %v940 = vmul.f32 %v935, %v939
        %v941 = vmul.f32 %v606, %v940
        %vm942 = vcmp.eq.f32.partialorder %v606, inf
        %v943 = vsel %vm942, %v606, %v941
        %vm944 = vcmp.eq.f32.partialorder %v606, 0.0
        %v945 = vand.u32 %v606, 2147483648
        %v946 = vsel %vm944, %v945, %v943
        %v947 = vrsqrt.pop %v607
        %v948 = vmul.f32 %v947, %v607
        %v949 = vmul.f32 %v948, %v947
        %v950 = vmul.f32 0.5, %v949
        %v951 = vsub.f32 1.5, %v950
        %v952 = vmul.f32 %v947, %v951
        %v953 = vmul.f32 %v607, %v952
        %vm954 = vcmp.eq.f32.partialorder %v607, inf
        %v955 = vsel %vm954, %v607, %v953
        %vm956 = vcmp.eq.f32.partialorder %v607, 0.0
        %v957 = vand.u32 %v607, 2147483648
        %v958 = vsel %vm956, %v957, %v955
        %v959 = vrsqrt.pop %v608
        %v960 = vmul.f32 %v959, %v608
        %v961 = vmul.f32 %v960, %v959
        %v962 = vmul.f32 0.5, %v961
        %v963 = vsub.f32 1.5, %v962
        %v964 = vmul.f32 %v959, %v963
        %v965 = vmul.f32 %v608, %v964
        %vm966 = vcmp.eq.f32.partialorder %v608, inf
        %v967 = vsel %vm966, %v608, %v965
        %vm968 = vcmp.eq.f32.partialorder %v608, 0.0
        %v969 = vand.u32 %v608, 2147483648
        %v970 = vsel %vm968, %v969, %v967
        %v971 = vrsqrt.pop %v609
        %v972 = vmul.f32 %v971, %v609
        %v973 = vmul.f32 %v972, %v971
        %v974 = vmul.f32 0.5, %v973
        %v975 = vsub.f32 1.5, %v974
        %v976 = vmul.f32 %v971, %v975
        %v977 = vmul.f32 %v609, %v976
        %vm978 = vcmp.eq.f32.partialorder %v609, inf
        %v979 = vsel %vm978, %v609, %v977
        %vm980 = vcmp.eq.f32.partialorder %v609, 0.0
        %v981 = vand.u32 %v609, 2147483648
        %v982 = vsel %vm980, %v981, %v979
        %v983 = vrsqrt.pop %v610
        %v984 = vmul.f32 %v983, %v610
        %v985 = vmul.f32 %v984, %v983
        %v986 = vmul.f32 0.5, %v985
        %v987 = vsub.f32 1.5, %v986
        %v988 = vmul.f32 %v983, %v987
        %v989 = vmul.f32 %v610, %v988
        %vm990 = vcmp.eq.f32.partialorder %v610, inf
        %v991 = vsel %vm990, %v610, %v989
        %vm992 = vcmp.eq.f32.partialorder %v610, 0.0
        %v993 = vand.u32 %v610, 2147483648
        %v994 = vsel %vm992, %v993, %v991
        %v995 = vadd.f32 %v622, 1e-06
        %v996 = vadd.f32 %v634, 1e-06
        %v997 = vadd.f32 %v646, 1e-06
        %v998 = vadd.f32 %v658, 1e-06
        %v999 = vadd.f32 %v670, 1e-06
        %v1000 = vadd.f32 %v682, 1e-06
        %v1001 = vadd.f32 %v694, 1e-06
        %v1002 = vadd.f32 %v706, 1e-06
        %v1003 = vadd.f32 %v718, 1e-06
        %v1004 = vadd.f32 %v730, 1e-06
        %v1005 = vadd.f32 %v742, 1e-06
        %v1006 = vadd.f32 %v754, 1e-06
        %v1007 = vadd.f32 %v766, 1e-06
        %v1008 = vadd.f32 %v778, 1e-06
        %v1009 = vadd.f32 %v790, 1e-06
        %v1010 = vadd.f32 %v802, 1e-06
        %v1011 = vadd.f32 %v814, 1e-06
        %v1012 = vadd.f32 %v826, 1e-06
        %v1013 = vadd.f32 %v838, 1e-06
        %v1014 = vadd.f32 %v850, 1e-06
        %v1015 = vadd.f32 %v862, 1e-06
        %v1016 = vadd.f32 %v874, 1e-06
        %v1017 = vadd.f32 %v886, 1e-06
        %v1018 = vadd.f32 %v898, 1e-06
        %v1019 = vadd.f32 %v910, 1e-06
        %v1020 = vadd.f32 %v922, 1e-06
        %v1021 = vadd.f32 %v934, 1e-06
        %v1022 = vadd.f32 %v946, 1e-06
        %v1023 = vadd.f32 %v958, 1e-06
        %v1024 = vadd.f32 %v970, 1e-06
        %v1025 = vadd.f32 %v982, 1e-06
        %v1026 = vadd.f32 %v994, 1e-06
        %v1027 = vrcp.pop %v995
        %v1028 = vrcp.pop %v996
        %v1029 = vrcp.pop %v997
        %v1030 = vrcp.pop %v998
        %v1031 = vrcp.pop %v999
        %v1032 = vrcp.pop %v1000
        %v1033 = vrcp.pop %v1001
        %v1034 = vrcp.pop %v1002
        %v1035 = vrcp.pop %v1003
        %v1036 = vrcp.pop %v1004
        %v1037 = vrcp.pop %v1005
        %v1038 = vrcp.pop %v1006
        %v1039 = vrcp.pop %v1007
        %v1040 = vrcp.pop %v1008
        %v1041 = vrcp.pop %v1009
        %v1042 = vrcp.pop %v1010
        %v1043 = vrcp.pop %v1011
        %v1044 = vrcp.pop %v1012
        %v1045 = vrcp.pop %v1013
        %v1046 = vrcp.pop %v1014
        %v1047 = vrcp.pop %v1015
        %v1048 = vrcp.pop %v1016
        %v1049 = vrcp.pop %v1017
        %v1050 = vrcp.pop %v1018
        %v1051 = vrcp.pop %v1019
        %v1052 = vrcp.pop %v1020
        %v1053 = vrcp.pop %v1021
        %v1054 = vrcp.pop %v1022
        %v1055 = vrcp.pop %v1023
        %v1056 = vrcp.pop %v1024
        %v1057 = vrcp.pop %v1025
        %v1058 = vrcp.pop %v1026
        %v1059 = vstv %s314
        %v1060 = vmul.f32 %v1059, %v1027
        %v1061 = vmul.f32 %v1059, %v1028
        %v1062 = vmul.f32 %v1059, %v1029
        %v1063 = vmul.f32 %v1059, %v1030
        %v1064 = vmul.f32 %v1059, %v1031
        %v1065 = vmul.f32 %v1059, %v1032
        %v1066 = vmul.f32 %v1059, %v1033
        %v1067 = vmul.f32 %v1059, %v1034
        %v1068 = vmul.f32 %v1059, %v1035
        %v1069 = vmul.f32 %v1059, %v1036
        %v1070 = vmul.f32 %v1059, %v1037
        %v1071 = vmul.f32 %v1059, %v1038
        %v1072 = vmul.f32 %v1059, %v1039
        %v1073 = vmul.f32 %v1059, %v1040
        %v1074 = vmul.f32 %v1059, %v1041
        %v1075 = vmul.f32 %v1059, %v1042
        %v1076 = vmul.f32 %v1059, %v1043
        %v1077 = vmul.f32 %v1059, %v1044
        %v1078 = vmul.f32 %v1059, %v1045
        %v1079 = vmul.f32 %v1059, %v1046
        %v1080 = vmul.f32 %v1059, %v1047
        %v1081 = vmul.f32 %v1059, %v1048
        %v1082 = vmul.f32 %v1059, %v1049
        %v1083 = vmul.f32 %v1059, %v1050
        %v1084 = vmul.f32 %v1059, %v1051
        %v1085 = vmul.f32 %v1059, %v1052
        %v1086 = vmul.f32 %v1059, %v1053
        %v1087 = vmul.f32 %v1059, %v1054
        %v1088 = vmul.f32 %v1059, %v1055
        %v1089 = vmul.f32 %v1059, %v1056
        %v1090 = vmul.f32 %v1059, %v1057
        %v1091 = vmul.f32 %v1059, %v1058
        %v1092 = vmul.f32 %v451, %v1060
        %v1093 = vmul.f32 %v452, %v1061
        %v1094 = vmul.f32 %v453, %v1062
        %v1095 = vmul.f32 %v454, %v1063
        %v1096 = vmul.f32 %v455, %v1064
        %v1097 = vmul.f32 %v456, %v1065
        %v1098 = vmul.f32 %v457, %v1066
        %v1099 = vmul.f32 %v458, %v1067
        %v1100 = vmul.f32 %v459, %v1068
        %v1101 = vmul.f32 %v460, %v1069
        %v1102 = vmul.f32 %v461, %v1070
        %v1103 = vmul.f32 %v462, %v1071
        %v1104 = vmul.f32 %v463, %v1072
        %v1105 = vmul.f32 %v464, %v1073
        %v1106 = vmul.f32 %v465, %v1074
        %v1107 = vmul.f32 %v466, %v1075
        %v1108 = vmul.f32 %v467, %v1076
        %v1109 = vmul.f32 %v468, %v1077
        %v1110 = vmul.f32 %v469, %v1078
        %v1111 = vmul.f32 %v470, %v1079
        %v1112 = vmul.f32 %v471, %v1080
        %v1113 = vmul.f32 %v472, %v1081
        %v1114 = vmul.f32 %v473, %v1082
        %v1115 = vmul.f32 %v474, %v1083
        %v1116 = vmul.f32 %v475, %v1084
        %v1117 = vmul.f32 %v476, %v1085
        %v1118 = vmul.f32 %v477, %v1086
        %v1119 = vmul.f32 %v478, %v1087
        %v1120 = vmul.f32 %v479, %v1088
        %v1121 = vmul.f32 %v480, %v1089
        %v1122 = vmul.f32 %v481, %v1090
        %v1123 = vmul.f32 %v482, %v1091
        %v1124 = vstv %s315
        %v1125 = vadd.f32 %v1092, %v1124
        %v1126 = vadd.f32 %v1093, %v1124
        %v1127 = vadd.f32 %v1094, %v1124
        %v1128 = vadd.f32 %v1095, %v1124
        %v1129 = vadd.f32 %v1096, %v1124
        %v1130 = vadd.f32 %v1097, %v1124
        %v1131 = vadd.f32 %v1098, %v1124
        %v1132 = vadd.f32 %v1099, %v1124
        %v1133 = vadd.f32 %v1100, %v1124
        %v1134 = vadd.f32 %v1101, %v1124
        %v1135 = vadd.f32 %v1102, %v1124
        %v1136 = vadd.f32 %v1103, %v1124
        %v1137 = vadd.f32 %v1104, %v1124
        %v1138 = vadd.f32 %v1105, %v1124
        %v1139 = vadd.f32 %v1106, %v1124
        %v1140 = vadd.f32 %v1107, %v1124
        %v1141 = vadd.f32 %v1108, %v1124
        %v1142 = vadd.f32 %v1109, %v1124
        %v1143 = vadd.f32 %v1110, %v1124
        %v1144 = vadd.f32 %v1111, %v1124
        %v1145 = vadd.f32 %v1112, %v1124
        %v1146 = vadd.f32 %v1113, %v1124
        %v1147 = vadd.f32 %v1114, %v1124
        %v1148 = vadd.f32 %v1115, %v1124
        %v1149 = vadd.f32 %v1116, %v1124
        %v1150 = vadd.f32 %v1117, %v1124
        %v1151 = vadd.f32 %v1118, %v1124
        %v1152 = vadd.f32 %v1119, %v1124
        %v1153 = vadd.f32 %v1120, %v1124
        %v1154 = vadd.f32 %v1121, %v1124
        %v1155 = vadd.f32 %v1122, %v1124
        %v1156 = vadd.f32 %v1123, %v1124
        %v1157 = vpack.c.bf16 %v1126, %v1125
        %v1158 = vpack.c.bf16 %v1128, %v1127
        %v1159 = vpack.c.bf16 %v1130, %v1129
        %v1160 = vpack.c.bf16 %v1132, %v1131
        %v1161 = vpack.c.bf16 %v1134, %v1133
        %v1162 = vpack.c.bf16 %v1136, %v1135
        %v1163 = vpack.c.bf16 %v1138, %v1137
        %v1164 = vpack.c.bf16 %v1140, %v1139
        %v1165 = vpack.c.bf16 %v1142, %v1141
        %v1166 = vpack.c.bf16 %v1144, %v1143
        %v1167 = vpack.c.bf16 %v1146, %v1145
        %v1168 = vpack.c.bf16 %v1148, %v1147
        %v1169 = vpack.c.bf16 %v1150, %v1149
        %v1170 = vpack.c.bf16 %v1152, %v1151
        %v1171 = vpack.c.bf16 %v1154, %v1153
        %v1172 = vpack.c.bf16 %v1156, %v1155
        %v1173 = vld [vmem:[#allocation8] sm:$0xf]
        %v1174 = vld [vmem:[#allocation8 + $0x4] sm:$0xf]
        %v1175 = vld [vmem:[#allocation8 + $0x8] sm:$0xf]
        %v1176 = vld [vmem:[#allocation8 + $0xc] sm:$0xf]
        %v1177 = vld [vmem:[#allocation8 + $0x10] sm:$0xf]
        %v1178 = vld [vmem:[#allocation8 + $0x14] sm:$0xf]
        %v1179 = vld [vmem:[#allocation8 + $0x18] sm:$0xf]
        %v1180 = vld [vmem:[#allocation8 + $0x1c] sm:$0xf]
        %v1181 = vld [vmem:[#allocation8 + $0x20] sm:$0xf]
        %v1182 = vld [vmem:[#allocation8 + $0x24] sm:$0xf]
        %v1183 = vld [vmem:[#allocation8 + $0x28] sm:$0xf]
        %v1184 = vld [vmem:[#allocation8 + $0x2c] sm:$0xf]
        %v1185 = vld [vmem:[#allocation8 + $0x30] sm:$0xf]
        %v1186 = vld [vmem:[#allocation8 + $0x34] sm:$0xf]
        %v1187 = vld [vmem:[#allocation8 + $0x38] sm:$0xf]
        %v1188 = vld [vmem:[#allocation8 + $0x3c] sm:$0xf]
        %v1189 = vld [vmem:[%s312] sm:$0x1]
        %v1191 = vperm.slane %v1189, 0
        %v1209 = vunpack.c.l.b16 %v1173
        %v1210 = vunpack.c.l.b16 %v1174
        %v1211 = vunpack.c.l.b16 %v1175
        %v1212 = vunpack.c.l.b16 %v1176
        %v1213 = vunpack.c.l.b16 %v1177
        %v1214 = vunpack.c.l.b16 %v1178
        %v1215 = vunpack.c.l.b16 %v1179
        %v1216 = vunpack.c.l.b16 %v1180
        %v1217 = vunpack.c.l.b16 %v1181
        %v1218 = vunpack.c.l.b16 %v1182
        %v1219 = vunpack.c.l.b16 %v1183
        %v1220 = vunpack.c.l.b16 %v1184
        %v1221 = vunpack.c.l.b16 %v1185
        %v1222 = vunpack.c.l.b16 %v1186
        %v1223 = vunpack.c.l.b16 %v1187
        %v1224 = vunpack.c.l.b16 %v1188
        %v1225 = vpack.c.b16 %v1210, %v1209
        %v1226 = vpack.c.b16 %v1212, %v1211
        %v1227 = vpack.c.b16 %v1214, %v1213
        %v1228 = vpack.c.b16 %v1216, %v1215
        %v1229 = vpack.c.b16 %v1218, %v1217
        %v1230 = vpack.c.b16 %v1220, %v1219
        %v1231 = vpack.c.b16 %v1222, %v1221
        %v1232 = vpack.c.b16 %v1224, %v1223
        %1241 = vmatpush.bf16.msra.mxu0 %v1232
        %1242 = vmatpush.bf16.msra.mxu0 %v1231
        %1243 = vmatpush.bf16.msra.mxu0 %v1230
        %1244 = vmatpush.bf16.msra.mxu0 %v1229
        %1245 = vmatpush.bf16.msra.mxu0 %v1228
        %1246 = vmatpush.bf16.msra.mxu0 %v1227
        %1247 = vmatpush.bf16.msra.mxu0 %v1226
        %1248 = vmatpush.bf16.msra.mxu0 %v1225
        %1249 = vmatmul.bf16.gmra.mxu0 %v1157
        %v1250 = vpop.f32.mrf.mxu0
        %v1251 = vadd.f32 %v1191, %v1250
        %v1252 = vpop.f32.mrf.mxu0
        %v1253 = vadd.f32 %v1191, %v1252
        %1254 = vmatmul.bf16.gmra.mxu0 %v1158
        %v1255 = vpop.f32.mrf.mxu0
        %v1256 = vadd.f32 %v1191, %v1255
        %v1257 = vpop.f32.mrf.mxu0
        %v1258 = vadd.f32 %v1191, %v1257
        %1259 = vmatmul.bf16.gmra.mxu0 %v1159
        %v1260 = vpop.f32.mrf.mxu0
        %v1261 = vadd.f32 %v1191, %v1260
        %v1262 = vpop.f32.mrf.mxu0
        %v1263 = vadd.f32 %v1191, %v1262
        %1264 = vmatmul.bf16.gmra.mxu0 %v1160
        %v1265 = vpop.f32.mrf.mxu0
        %v1266 = vadd.f32 %v1191, %v1265
        %v1267 = vpop.f32.mrf.mxu0
        %v1268 = vadd.f32 %v1191, %v1267
        %1269 = vmatmul.bf16.gmra.mxu0 %v1161
        %v1270 = vpop.f32.mrf.mxu0
        %v1271 = vadd.f32 %v1191, %v1270
        %v1272 = vpop.f32.mrf.mxu0
        %v1273 = vadd.f32 %v1191, %v1272
        %1274 = vmatmul.bf16.gmra.mxu0 %v1162
        %v1275 = vpop.f32.mrf.mxu0
        %v1276 = vadd.f32 %v1191, %v1275
        %v1277 = vpop.f32.mrf.mxu0
        %v1278 = vadd.f32 %v1191, %v1277
        %1279 = vmatmul.bf16.gmra.mxu0 %v1163
        %v1280 = vpop.f32.mrf.mxu0
        %v1281 = vadd.f32 %v1191, %v1280
        %v1282 = vpop.f32.mrf.mxu0
        %v1283 = vadd.f32 %v1191, %v1282
        %1284 = vmatmul.bf16.gmra.mxu0 %v1164
        %v1285 = vpop.f32.mrf.mxu0
        %v1286 = vadd.f32 %v1191, %v1285
        %v1287 = vpop.f32.mrf.mxu0
        %v1288 = vadd.f32 %v1191, %v1287
        %1289 = vmatmul.bf16.gmra.mxu0 %v1165
        %v1290 = vpop.f32.mrf.mxu0
        %v1291 = vadd.f32 %v1191, %v1290
        %v1292 = vpop.f32.mrf.mxu0
        %v1293 = vadd.f32 %v1191, %v1292
        %1294 = vmatmul.bf16.gmra.mxu0 %v1166
        %v1295 = vpop.f32.mrf.mxu0
        %v1296 = vadd.f32 %v1191, %v1295
        %v1297 = vpop.f32.mrf.mxu0
        %v1298 = vadd.f32 %v1191, %v1297
        %1299 = vmatmul.bf16.gmra.mxu0 %v1167
        %v1300 = vpop.f32.mrf.mxu0
        %v1301 = vadd.f32 %v1191, %v1300
        %v1302 = vpop.f32.mrf.mxu0
        %v1303 = vadd.f32 %v1191, %v1302
        %1304 = vmatmul.bf16.gmra.mxu0 %v1168
        %v1305 = vpop.f32.mrf.mxu0
        %v1306 = vadd.f32 %v1191, %v1305
        %v1307 = vpop.f32.mrf.mxu0
        %v1308 = vadd.f32 %v1191, %v1307
        %1309 = vmatmul.bf16.gmra.mxu0 %v1169
        %v1310 = vpop.f32.mrf.mxu0
        %v1311 = vadd.f32 %v1191, %v1310
        %v1312 = vpop.f32.mrf.mxu0
        %v1313 = vadd.f32 %v1191, %v1312
        %1314 = vmatmul.bf16.gmra.mxu0 %v1170
        %v1315 = vpop.f32.mrf.mxu0
        %v1316 = vadd.f32 %v1191, %v1315
        %v1317 = vpop.f32.mrf.mxu0
        %v1318 = vadd.f32 %v1191, %v1317
        %1319 = vmatmul.bf16.gmra.mxu0 %v1171
        %v1320 = vpop.f32.mrf.mxu0
        %v1321 = vadd.f32 %v1191, %v1320
        %v1322 = vpop.f32.mrf.mxu0
        %v1323 = vadd.f32 %v1191, %v1322
        %1324 = vmatmul.bf16.gmra.mxu0 %v1172
        %v1325 = vpop.f32.mrf.mxu0
        %v1326 = vadd.f32 %v1191, %v1325
        %v1327 = vpop.f32.mrf.mxu0
        %v1328 = vadd.f32 %v1191, %v1327
        %1329 = vdwg.mxu0
        %v1330 = vadd.f32 %v316, %v1251
        %v1331 = vadd.f32 %v317, %v1253
        %v1332 = vadd.f32 %v318, %v1256
        %v1333 = vadd.f32 %v319, %v1258
        %v1334 = vadd.f32 %v320, %v1261
        %v1335 = vadd.f32 %v321, %v1263
        %v1336 = vadd.f32 %v322, %v1266
        %v1337 = vadd.f32 %v323, %v1268
        %v1338 = vadd.f32 %v324, %v1271
        %v1339 = vadd.f32 %v325, %v1273
        %v1340 = vadd.f32 %v326, %v1276
        %v1341 = vadd.f32 %v327, %v1278
        %v1342 = vadd.f32 %v328, %v1281
        %v1343 = vadd.f32 %v329, %v1283
        %v1344 = vadd.f32 %v330, %v1286
        %v1345 = vadd.f32 %v331, %v1288
        %v1346 = vadd.f32 %v332, %v1291
        %v1347 = vadd.f32 %v333, %v1293
        %v1348 = vadd.f32 %v334, %v1296
        %v1349 = vadd.f32 %v335, %v1298
        %v1350 = vadd.f32 %v336, %v1301
        %v1351 = vadd.f32 %v337, %v1303
        %v1352 = vadd.f32 %v338, %v1306
        %v1353 = vadd.f32 %v339, %v1308
        %v1354 = vadd.f32 %v340, %v1311
        %v1355 = vadd.f32 %v341, %v1313
        %v1356 = vadd.f32 %v342, %v1316
        %v1357 = vadd.f32 %v343, %v1318
        %v1358 = vadd.f32 %v344, %v1321
        %v1359 = vadd.f32 %v345, %v1323
        %v1360 = vadd.f32 %v346, %v1326
        %v1361 = vadd.f32 %v347, %v1328
        %1362 = vst [vmem:[%s308] sm:$0xff] %v1330
        %1363 = vst [vmem:[%s308 + $0x8] sm:$0xff] %v1331
        %1364 = vst [vmem:[%s308 + $0x10] sm:$0xff] %v1332
        %1365 = vst [vmem:[%s308 + $0x18] sm:$0xff] %v1333
        %1366 = vst [vmem:[%s308 + $0x20] sm:$0xff] %v1334
        %1367 = vst [vmem:[%s308 + $0x28] sm:$0xff] %v1335
        %1368 = vst [vmem:[%s308 + $0x30] sm:$0xff] %v1336
        %1369 = vst [vmem:[%s308 + $0x38] sm:$0xff] %v1337
        %1370 = vst [vmem:[%s308 + $0x40] sm:$0xff] %v1338
        %1371 = vst [vmem:[%s308 + $0x48] sm:$0xff] %v1339
        %1372 = vst [vmem:[%s308 + $0x50] sm:$0xff] %v1340
        %1373 = vst [vmem:[%s308 + $0x58] sm:$0xff] %v1341
        %1374 = vst [vmem:[%s308 + $0x60] sm:$0xff] %v1342
        %1375 = vst [vmem:[%s308 + $0x68] sm:$0xff] %v1343
        %1376 = vst [vmem:[%s308 + $0x70] sm:$0xff] %v1344
        %1377 = vst [vmem:[%s308 + $0x78] sm:$0xff] %v1345
        %1378 = vst [vmem:[%s308 + $0x80] sm:$0xff] %v1346
        %1379 = vst [vmem:[%s308 + $0x88] sm:$0xff] %v1347
        %1380 = vst [vmem:[%s308 + $0x90] sm:$0xff] %v1348
        %1381 = vst [vmem:[%s308 + $0x98] sm:$0xff] %v1349
        %1382 = vst [vmem:[%s308 + $0xa0] sm:$0xff] %v1350
        %1383 = vst [vmem:[%s308 + $0xa8] sm:$0xff] %v1351
        %1384 = vst [vmem:[%s308 + $0xb0] sm:$0xff] %v1352
        %1385 = vst [vmem:[%s308 + $0xb8] sm:$0xff] %v1353
        %1386 = vst [vmem:[%s308 + $0xc0] sm:$0xff] %v1354
        %1387 = vst [vmem:[%s308 + $0xc8] sm:$0xff] %v1355
        %1388 = vst [vmem:[%s308 + $0xd0] sm:$0xff] %v1356
        %1389 = vst [vmem:[%s308 + $0xd8] sm:$0xff] %v1357
        %1390 = vst [vmem:[%s308 + $0xe0] sm:$0xff] %v1358
        %1391 = vst [vmem:[%s308 + $0xe8] sm:$0xff] %v1359
        %1392 = vst [vmem:[%s308 + $0xf0] sm:$0xff] %v1360
        %1393 = vst [vmem:[%s308 + $0xf8] sm:$0xff] %v1361
        %s1394 = sand.u32 %s167, 1
        %s1395 = scalar_lea.sflag [#allocation5], %s1394
        %s1396 = sand.u32 %s167, 1
        %s1397 = smul.addr %s1396, 256
        %s1398 = scalar_lea.vmem [#allocation10], %s1397
        // Predicated region
        $region53: #{tpu_custom_call.1} parent=39 // pred_check
          %p1399 = pneg %p177
        $region54: #{tpu_custom_call.1} parent=39 // pred_check_branch
          %1401 = sbr.rel (%p1399) target = $region56
        $region55: #{tpu_custom_call.1} parent=39 // pred_region
          %s1402 = smul.u32 32, %s29
          %1404 = vsyncadd %s1395, 0
          %s1405 = sadd.s32 %s30, %s1402
          %s1406 = smul.addr %s1405, 8
          %s1407 = scalar_lea.hbm %s5, %s1406
          %s1408 = sshll.u32 %s1398, 4
          %s1409 = int_to_ptr.vmem [resolvable:$true] %s1408
          %s1410 = sshll.u32 %s1407, 4
          %s1411 = int_to_ptr.hbm [resolvable:$true] %s1410
          %1416 = dma.vmem_to_hbm [thread:$0]  %s1409, 4096, %s1411, %s1395, 128, 128, 8
        $region56: #{tpu_custom_call.1} parent=39 // pred_fallthru
          _
      $region40: #{tpu_custom_call.1} parent=5 // pred_fallthru
        _
      %p1417 = scmp.le.s32.totalorder 2, %s20
      // Predicated region
      $region57: #{tpu_custom_call.1} parent=5 // pred_check
        %p1418 = pneg %p1417
      $region58: #{tpu_custom_call.1} parent=5 // pred_check_branch
        %1420 = sbr.rel (%p1418) target = $region60
      $region59: #{tpu_custom_call.1} parent=5 // pred_region
        %s1421 = ssub.s32 %s20, 2
        // Predicated region
        $region61: #{tpu_custom_call.1} parent=59 // pred_check
          %p1422 = pneg %p183
        $region62: #{tpu_custom_call.1} parent=59 // pred_check_branch
          %1424 = sbr.rel (%p1422) target = $region64
        $region63: #{tpu_custom_call.1} parent=59 // pred_region
          %s1425 = sand.u32 %s168, 1
          %s1426 = scalar_lea.sflag [#allocation5], %s1425
          %s1427 = sand.u32 %s168, 1
          %s1428 = smul.addr %s1427, 256
          %s1429 = scalar_lea.vmem [#allocation10], %s1428
          %1431 = dma.done %s1426, 4096
        $region64: #{tpu_custom_call.1} parent=59 // pred_fallthru
          _
      $region60: #{tpu_custom_call.1} parent=5 // pred_fallthru
        _
    $region6: #{tpu_custom_call.1} parent=1 // loop_footer
      %s24 = sadd.s32 1, %s20
    $region7: #{tpu_custom_call.1} parent=1 // loop_footer_branch
      %19 = sbr.rel target = $region3
    $region8: #{tpu_custom_call.1} parent=1 // loop_exit
      _
    %1432 = vsyncpa [#allocation4], 1
    %s1433 = scalar_lea.sflag [#allocation4], 1
    %1434 = vsyncpa %s1433, 1
    %1435 = vsyncpa [#allocation9], 1
    %1436 = vsyncpa [#allocation5], 1
    %s1437 = scalar_lea.sflag [#allocation5], 1
    %1438 = vsyncpa %s1437, 1
    %1439 = vsyncpa [#allocation6], 1
    %s1440 = scalar_lea.sflag [#allocation6], 1
    %1441 = vsyncpa %s1440, 1

</llo_original>
